<compile_context>
chip_gen: v6e
topology: v6e:2x2x1
jax: 0.10.0
libtpu: 0.0.40
codegen_flags: <defaults>
</compile_context>

<pallas_src>
import jax
import jax.numpy as jnp
from jax import lax
from jax.experimental import pallas as pl
from jax.experimental.pallas import tpu as pltpu

LRELU_SLOPE = 0.1
# Tiny guard so an all-zero feature row does not produce NaN (the PyTorch
# reference would NaN here); numerically invisible for any real feature.
_NORM_EPS = 1e-24
_LANE = 128


def _round_up(x, m):
    return ((x + m - 1) // m) * m


def _vmem_budget_bytes():
    """Generation-aware VMEM budget: ~75% of physical capacity
    (v5e/v6e: 128 MiB -> 96 MiB, v7x: 64 MiB -> 48 MiB)."""
    try:
        cap = pltpu.get_tpu_info().vmem_capacity_bytes
    except Exception:                      # interpret mode / unknown chip
        cap = 64 * 1024 * 1024
    return int(cap * 3 // 4)


def _pick_block_k(feat_in, batch, d_pad, budget):
    """Largest K tile (multiple of 128) whose complete VMEM footprint
    (double-buffered bf16 w & x tiles + f32 accumulator + resident blocks +
    headroom) fits `budget`, tie-broken to minimise zero-padded weight rows
    streamed from HBM."""
    fixed = (batch * d_pad * 4            # acc_ref scratch
             + 2 * d_pad * 4              # t0n double-buffer
             + 2 * batch * _LANE * 4      # output block double-buffer
             + (2 << 20))                 # compiler-internal headroom
    f128 = _round_up(feat_in, _LANE)
    best_tk, best_cost = _LANE, None
    for tk in (8192, 4096, 2048, 1024, 512, 256, _LANE):
        if tk > f128:
            continue
        stream = 2 * (tk * d_pad * 2 + batch * tk * 2)   # dbl-buffered bf16 w + x
        if fixed + stream > budget:
            continue
        cost = pl.cdiv(feat_in, tk) * tk                 # padded rows streamed
        if best_cost is None or cost < best_cost:
            best_tk, best_cost = tk, cost
    return best_tk


# --------------------------------------------------------------------------
# Kernel 1: per-clip K-streamed image projection -> L2 normalise -> class-0
#           cosine logit (scaled by logit_scale), lane-broadcast output.
# --------------------------------------------------------------------------
def _class0_logits_kernel(ls_ref, x_ref, w_ref, t0n_ref, out_ref, acc_ref):
    # ls_ref : SMEM (1,)            logit_scale.exp()
    # x_ref  : VMEM (B, tk)         bf16 image K-tile (shared across clips)
    # w_ref  : VMEM (tk, D_pad)     bf16 projection K-tile of clip c
    # t0n_ref: VMEM (1, D_pad)      f32 pre-normalised class-0 text feature
    # out_ref: VMEM (B, 128)        class-0 logit broadcast across lanes
    # acc_ref: VMEM (B, D_pad)      f32 accumulator scratch (per core)
    k = pl.program_id(1)

    @pl.when(k == 0)
    def _init():
        acc_ref[...] = jnp.zeros_like(acc_ref)

    # Streamed K step: bf16 MXU matmul, f32 accumulate.
    acc_ref[...] += jnp.dot(x_ref[...], w_ref[...],
                            preferred_element_type=jnp.float32)

    @pl.when(k == pl.num_programs(1) - 1)
    def _finalize():
        feats = acc_ref[...]                                   # (B, D_pad) f32
        ls = ls_ref[0]
        t0 = t0n_ref[...]                                      # (1, D_pad)
        inv = lax.rsqrt(jnp.sum(feats * feats, axis=-1, keepdims=True)
                        + _NORM_EPS)                           # EUP rsqrt
        logit = (ls * inv) * jnp.sum(feats * t0, axis=-1, keepdims=True)  # (B,1)
        # Lane-dense store: broadcast the scalar-per-row logit across 128 lanes.
        out_ref[...] = jnp.broadcast_to(logit, out_ref.shape)


def _class0_logits(x_pad, w_img, t0n, ls_exp, *, block_k):
    """x_pad: (B, F_pad) bf16; w_img: (num_clip, F_pad, D_pad) bf16;
    t0n: (num_clip, 1, D_pad) f32; ls_exp: (1,) f32.
    Returns (B, num_clip*128) f32: clip c's class-0 logit broadcast over
    lanes [c*128, (c+1)*128)."""
    B, F_pad = x_pad.shape
    num_clip, _, d_pad = w_img.shape
    assert F_pad % block_k == 0, (F_pad, block_k)
    assert d_pad % _LANE == 0, d_pad
    nk = F_pad // block_k

    return pl.pallas_call(
        _class0_logits_kernel,
        out_shape=jax.ShapeDtypeStruct((B, num_clip * _LANE), jnp.float32),
        grid=(num_clip, nk),
        in_specs=[
            pl.BlockSpec(memory_space=pltpu.MemorySpace.SMEM),           # logit_scale
            pl.BlockSpec((B, block_k), lambda c, k: (0, k)),             # x (K-stream)
            pl.BlockSpec((None, block_k, d_pad), lambda c, k: (c, k, 0)),  # w_img
            pl.BlockSpec((None, 1, d_pad), lambda c, k: (c, 0, 0)),      # text class-0
        ],
        out_specs=pl.BlockSpec((B, _LANE), lambda c, k: (0, c)),
        scratch_shapes=[pltpu.VMEM((B, d_pad), jnp.float32)],
        compiler_params=pltpu.CompilerParams(
            # clip axis shards across TensorCores on v7x; K is a reduction.
            dimension_semantics=("parallel", "arbitrary"),
            vmem_limit_bytes=_vmem_budget_bytes(),
        ),
    )(ls_exp, x_pad, w_img, t0n)


# --------------------------------------------------------------------------
# Kernel 2: NonLinearRegressor (Linear -> LeakyReLU -> Linear -> LeakyReLU ->
#           Linear), first Linear folded into a lane-dense matmul against a
#           one-hot-expanded W1 consuming the padded logit slab directly.
# --------------------------------------------------------------------------
def _regressor_kernel(lg_ref, w1b_ref, b1_ref, w2_ref, b2_ref, w3_ref, b3_ref,
                      out_ref):
    h = jnp.dot(lg_ref[...], w1b_ref[...],
                preferred_element_type=jnp.float32) + b1_ref[...]
    h = jnp.where(h > 0, h, LRELU_SLOPE * h)
    h = jnp.dot(h, w2_ref[...], preferred_element_type=jnp.float32) + b2_ref[...]
    h = jnp.where(h > 0, h, LRELU_SLOPE * h)
    out = jnp.dot(h, w3_ref[...], preferred_element_type=jnp.float32) + b3_ref[...]
    out_ref[...] = out.astype(out_ref.dtype)


def _const_spec(shape):
    nd = len(shape)
    return pl.BlockSpec(tuple(shape), lambda i, _nd=nd: (0,) * _nd)


def _regressor(logits_pad, w1_big, b1, w2, b2, w3, b3):
    B = logits_pad.shape[0]
    args = (logits_pad, w1_big, b1, w2, b2, w3, b3)
    return pl.pallas_call(
        _regressor_kernel,
        out_shape=jax.ShapeDtypeStruct((B, 1), jnp.float32),
        grid=(1,),
        in_specs=[_const_spec(a.shape) for a in args],
        out_specs=_const_spec((B, 1)),
        compiler_params=pltpu.CompilerParams(
            dimension_semantics=("arbitrary",)),
    )(*args)


# --------------------------------------------------------------------------
# Parameter packing (one-time, outside the per-image hot path) and forward.
# --------------------------------------------------------------------------
def prepare_params(params, *, batch_size):
    """One-time zero-padding / packing of the learned parameters so the
    per-forward hot path never copies weight-sized tensors.
    Returns (arrays_dict, block_k)."""
    num_clip, feat_in, d = params["w_img"].shape
    d_pad = _round_up(d, _LANE)
    block_k = _pick_block_k(feat_in, batch_size, d_pad, _vmem_budget_bytes())
    f_pad = _round_up(feat_in, block_k)

    # Explicit zero-fill of all padding (F and D) so padded rows/cols can never
    # contribute NaN/Inf to the accumulator.
    w = params["w_img"].astype(jnp.float32)
    w = jnp.pad(w, ((0, 0), (0, f_pad - feat_in), (0, d_pad - d)))
    w = w.astype(jnp.bfloat16)

    # Only logits[:, 0] is consumed -> pre-normalise each clip's class-0 text
    # feature once (over the true D, then zero-pad the lanes).
    t0 = params["text_feats"][:, 0, :].astype(jnp.float32)
    t0n = t0 * lax.rsqrt(jnp.sum(t0 * t0, axis=-1, keepdims=True) + _NORM_EPS)
    t0n = jnp.pad(t0n, ((0, 0), (0, d_pad - d))).reshape(num_clip, 1, d_pad)

    # logit_scale is a learned parameter; forward applies exp() (as in CLIP).
    ls = jnp.exp(params["logit_scale"]).reshape(1).astype(jnp.float32)

    # Fold Linear1 into a lane-dense matmul on the padded logit slab:
    # row c*128 of w1_big carries w1[c, :]; all other rows are zero.
    n_hidden = params["w1"].shape[1]
    w1_big = jnp.zeros((num_clip * _LANE, n_hidden), jnp.float32)
    w1_big = w1_big.at[jnp.arange(num_clip) * _LANE].set(
        params["w1"].astype(jnp.float32))

    arrays = {
        "w_img": w, "t0n": t0n, "logit_scale_exp": ls, "w1_big": w1_big,
        "b1": params["b1"].astype(jnp.float32),
        "w2": params["w2"].astype(jnp.float32),
        "b2": params["b2"].astype(jnp.float32),
        "w3": params["w3"].astype(jnp.float32),
        "b3": params["b3"].astype(jnp.float32),
    }
    return arrays, block_k


def maple_iqa_forward(image, packed, *, block_k):
    """image: (B, C, H, W) NCHW.  packed: arrays from prepare_params.
    Returns (B, 1) predicted score (num_clip > 1 regressor branch), or the
    raw class-0 logits when num_clip == 1 (as in the PyTorch module)."""
    B = image.shape[0]
    num_clip, f_pad, _ = packed["w_img"].shape

    # Pre-cast x to bf16 (halves its HBM stream / VMEM double-buffer) and
    # zero-pad it to the weight's padded F.
    x = image.reshape(B, -1).astype(jnp.bfloat16)
    if f_pad > x.shape[1]:
        x = jnp.pad(x, ((0, 0), (0, f_pad - x.shape[1])))

    logits_pad = _class0_logits(x, packed["w_img"], packed["t0n"],
                                packed["logit_scale_exp"], block_k=block_k)
    if num_clip == 1:
        return logits_pad[:, 0:1]
    return _regressor(logits_pad, packed["w1_big"], packed["b1"],
                      packed["w2"], packed["b2"], packed["w3"], packed["b3"])


def init_params(key, *, num_clip, n_cls, feat_in, embed_dim, n_hidden=128):
    ks = jax.random.split(key, 5)
    std = 0.02
    return {
        # Stand-in per-clip image-encoder projections (num_clip, F, D).
        "w_img": std * jax.random.normal(
            ks[0], (num_clip, feat_in, embed_dim), jnp.float32),
        # Stand-in per-clip text features (one row per classname).
        "text_feats": std * jax.random.normal(
            ks[1], (num_clip, n_cls, embed_dim), jnp.float32),
        # CLIP's learned logit_scale parameter (log(1/0.07) at init).
        "logit_scale": jnp.asarray(jnp.log(1.0 / 0.07), jnp.float32),
        # NonLinearRegressor(n_input=num_clip, n_output=1, n_hidden=128)
        "w1": std * jax.random.normal(ks[2], (num_clip, n_hidden), jnp.float32),
        "b1": jnp.zeros((1, n_hidden), jnp.float32),
        "w2": std * jax.random.normal(ks[3], (n_hidden, n_hidden), jnp.float32),
        "b2": jnp.zeros((1, n_hidden), jnp.float32),
        "w3": std * jax.random.normal(ks[4], (n_hidden, 1), jnp.float32),
        "b3": jnp.zeros((1, 1), jnp.float32),
    }


def _reference_forward(image, params):
    """Pure-JAX f32 reference of the same stand-in forward (tolerance check)."""
    B = image.shape[0]
    x = image.reshape(B, -1).astype(jnp.float32)
    num_clip = params["text_feats"].shape[0]
    ls = jnp.exp(params["logit_scale"])
    cols = []
    for c in range(num_clip):
        feats = x @ params["w_img"][c]
        feats = feats / jnp.linalg.norm(feats, axis=-1, keepdims=True)
        t = params["text_feats"][c]
        t = t / jnp.linalg.norm(t, axis=-1, keepdims=True)
        logits = ls * (feats @ t.T)
        cols.append(logits[:, 0:1])
    ll = jnp.concatenate(cols, axis=1).astype(jnp.float32)
    h = ll @ params["w1"] + params["b1"]
    h = jnp.where(h > 0, h, LRELU_SLOPE * h)
    h = h @ params["w2"] + params["b2"]
    h = jnp.where(h > 0, h, LRELU_SLOPE * h)
    return h @ params["w3"] + params["b3"]


if __name__ == "__main__":
    # Small deterministic shapes.
    B, C, H, W = 2, 4, 16, 16        # image: NCHW -> F = 1024
    num_clip = 2                     # >1 so the regressor branch runs
    n_cls = 8                        # classnames per clip model
    embed_dim = 32                   # CLIP joint embedding dim (stand-in)

    key = jax.random.PRNGKey(0)
    k_img, k_par = jax.random.split(key)
    image = jax.random.normal(k_img, (B, C, H, W), jnp.float32)
    params = init_params(k_par, num_clip=num_clip, n_cls=n_cls,
                         feat_in=C * H * W, embed_dim=embed_dim)

    # One-time pack/pad with an auto-picked, VMEM-budget-aware K tile.
    packed, tk = prepare_params(params, batch_size=B)
    fwd = jax.jit(maple_iqa_forward, static_argnames=("block_k",))

    pred = jax.block_until_ready(fwd(image, packed, block_k=tk))
    assert pred.shape == (B, 1) and pred.dtype == jnp.float32
    assert bool(jnp.all(jnp.isfinite(pred)))

    # Forced multi-step K pipeline (exercises init/accumulate/finalize path).
    pred_tiled = jax.block_until_ready(fwd(image, packed, block_k=256))
    assert bool(jnp.allclose(pred_tiled, pred, rtol=1e-3, atol=1e-4))

    # Tolerance check vs pure-f32 reference (kernel matmul runs in bf16).
    ref = _reference_forward(image, params)
    assert bool(jnp.allclose(pred, ref, rtol=1e-1, atol=1e-2)), (pred, ref)

    print("KERNEL_OK")
</pallas_src>

<mosaic_0001>
module attributes {stable_mosaic.version = 11 : i64} {
  func.func @_class0_logits_kernel(%arg0: i32, %arg1: i32, %arg2: memref<1xf32, #tpu.memory_space<smem>>, %arg3: memref<2x1024xbf16, #tpu.memory_space<vmem>>, %arg4: memref<1x1024x128xbf16, #tpu.memory_space<vmem>>, %arg5: memref<1x1x128xf32, #tpu.memory_space<vmem>>, %arg6: memref<2x128xf32, #tpu.memory_space<vmem>>, %arg7: memref<2x128xf32, #tpu.memory_space<vmem>>) attributes {dimension_semantics = [#tpu.dimension_semantics<parallel>, #tpu.dimension_semantics<arbitrary>], iteration_bounds = array<i64: 2, 1>, scalar_prefetch = 0 : i64, scratch_operands = 1 : i64, tpu.core_type = #tpu.core_type<tc>, window_params = [{transform_indices = @transform_0, window_bounds = array<i64: 1>}, {transform_indices = @transform_1, window_bounds = array<i64: 2, 1024>}, {transform_indices = @transform_2, window_bounds = array<i64: 1, 1024, 128>}, {transform_indices = @transform_3, window_bounds = array<i64: 1, 1, 128>}, {transform_indices = @transform_4, window_bounds = array<i64: 2, 128>}]} {
    %c0_i32 = arith.constant 0 : i32
    %0 = arith.cmpi eq, %arg1, %c0_i32 : i32
    %1 = arith.extui %0 : i1 to i32
    %c0_i32_0 = arith.constant 0 : i32
    %2 = arith.cmpi ne, %1, %c0_i32_0 : i32
    scf.if %2 {
      %cst_11 = arith.constant 0.000000e+00 : f32
      %13 = vector.broadcast %cst_11 : f32 to vector<2x128xf32>
      %c0_12 = arith.constant 0 : index
      %c0_13 = arith.constant 0 : index
      %14 = vector.load %arg7[%c0_12, %c0_13] : memref<2x128xf32, #tpu.memory_space<vmem>>, vector<2x128xf32>
      tpu.vector_store %arg7[%c0_12, %c0_13], %13 {strides = array<i32>} : memref<2x128xf32, #tpu.memory_space<vmem>>, vector<2x128xf32>,
    } else {
    }
    %c0 = arith.constant 0 : index
    %c0_1 = arith.constant 0 : index
    %3 = vector.load %arg7[%c0, %c0_1] : memref<2x128xf32, #tpu.memory_space<vmem>>, vector<2x128xf32>
    %c0_2 = arith.constant 0 : index
    %c0_3 = arith.constant 0 : index
    %4 = vector.load %arg3[%c0_2, %c0_3] : memref<2x1024xbf16, #tpu.memory_space<vmem>>, vector<2x1024xbf16>
    %c0_4 = arith.constant 0 : index
    %c0_5 = arith.constant 0 : index
    %c0_6 = arith.constant 0 : index
    %5 = vector.load %arg4[%c0_4, %c0_5, %c0_6] : memref<1x1024x128xbf16, #tpu.memory_space<vmem>>, vector<1x1024x128xbf16>
    %6 = vector.shape_cast %5 : vector<1x1024x128xbf16> to vector<1024x128xbf16>
    %cst = arith.constant dense<0.000000e+00> : vector<2x128xf32>
    %7 = tpu.matmul %4, %6, %cst {dimension_numbers = #tpu.dot_dimension_numbers<[1], [0], [0], [1], [0, 0, 1, 1], [], []>} : vector<2x1024xbf16>, vector<1024x128xbf16>, vector<2x128xf32> -> vector<2x128xf32>
    %8 = arith.addf %3, %7 : vector<2x128xf32>
    %c0_7 = arith.constant 0 : index
    %c0_8 = arith.constant 0 : index
    %9 = vector.load %arg7[%c0_7, %c0_8] : memref<2x128xf32, #tpu.memory_space<vmem>>, vector<2x128xf32>
    tpu.vector_store %arg7[%c0_7, %c0_8], %8 {strides = array<i32>} : memref<2x128xf32, #tpu.memory_space<vmem>>, vector<2x128xf32>,
    %c0_i32_9 = arith.constant 0 : i32
    %10 = arith.cmpi eq, %arg1, %c0_i32_9 : i32
    %11 = arith.extui %10 : i1 to i32
    %c0_i32_10 = arith.constant 0 : i32
    %12 = arith.cmpi ne, %11, %c0_i32_10 : i32
    scf.if %12 {
      %c0_11 = arith.constant 0 : index
      %c0_12 = arith.constant 0 : index
      %13 = vector.load %arg7[%c0_11, %c0_12] : memref<2x128xf32, #tpu.memory_space<vmem>>, vector<2x128xf32>
      %c0_13 = arith.constant 0 : index
      %14 = memref.load %arg2[%c0_13] : memref<1xf32, #tpu.memory_space<smem>>
      %c0_14 = arith.constant 0 : index
      %c0_15 = arith.constant 0 : index
      %c0_16 = arith.constant 0 : index
      %15 = vector.load %arg5[%c0_14, %c0_15, %c0_16] : memref<1x1x128xf32, #tpu.memory_space<vmem>>, vector<1x1x128xf32>
      %16 = vector.shape_cast %15 : vector<1x1x128xf32> to vector<1x128xf32>
      %17 = arith.mulf %13, %13 : vector<2x128xf32>
      %cst_17 = arith.constant dense<0.000000e+00> : vector<2xf32>
      %18 = vector.multi_reduction <add>, %17, %cst_17 [1] : vector<2x128xf32> to vector<2xf32>
      %19 = vector.shape_cast %18 : vector<2xf32> to vector<2x1xf32>
      %cst_18 = arith.constant 1.000000e-24 : f32
      %20 = vector.broadcast %cst_18 : f32 to vector<2x1xf32>
      %21 = arith.addf %19, %20 : vector<2x1xf32>
      %22 = math.rsqrt %21 : vector<2x1xf32>
      %23 = vector.broadcast %14 : f32 to vector<2x1xf32>
      %24 = arith.mulf %23, %22 : vector<2x1xf32>
      %25 = vector.broadcast %16 : vector<1x128xf32> to vector<2x128xf32>
      %26 = arith.mulf %13, %25 : vector<2x128xf32>
      %cst_19 = arith.constant dense<0.000000e+00> : vector<2xf32>
      %27 = vector.multi_reduction <add>, %26, %cst_19 [1] : vector<2x128xf32> to vector<2xf32>
      %28 = vector.shape_cast %27 : vector<2xf32> to vector<2x1xf32>
      %29 = arith.mulf %24, %28 : vector<2x1xf32>
      %30 = vector.shape_cast %29 : vector<2x1xf32> to vector<2x1xf32>
      %31 = vector.broadcast %30 : vector<2x1xf32> to vector<2x128xf32>
      %c0_20 = arith.constant 0 : index
      %c0_21 = arith.constant 0 : index
      %32 = vector.load %arg6[%c0_20, %c0_21] : memref<2x128xf32, #tpu.memory_space<vmem>>, vector<2x128xf32>
      tpu.vector_store %arg6[%c0_20, %c0_21], %31 {strides = array<i32>} : memref<2x128xf32, #tpu.memory_space<vmem>>, vector<2x128xf32>,
    } else {
    }
    return
  }
  func.func @transform_0(%arg0: i32, %arg1: i32) -> i32 {
    %c0_i32 = arith.constant 0 : i32
    %c0_i32_0 = arith.constant 0 : i32
    return %c0_i32 : i32
  }
  func.func @transform_1(%arg0: i32, %arg1: i32) -> (i32, i32) {
    %c0_i32 = arith.constant 0 : i32
    %c0_i32_0 = arith.constant 0 : i32
    return %c0_i32, %arg1 : i32, i32
  }
  func.func @transform_2(%arg0: i32, %arg1: i32) -> (i32, i32, i32) {
    %c0_i32 = arith.constant 0 : i32
    %c0_i32_0 = arith.constant 0 : i32
    return %arg0, %arg1, %c0_i32 : i32, i32, i32
  }
  func.func @transform_3(%arg0: i32, %arg1: i32) -> (i32, i32, i32) {
    %c0_i32 = arith.constant 0 : i32
    %c0_i32_0 = arith.constant 0 : i32
    %c0_i32_1 = arith.constant 0 : i32
    return %arg0, %c0_i32, %c0_i32_0 : i32, i32, i32
  }
  func.func @transform_4(%arg0: i32, %arg1: i32) -> (i32, i32) {
    %c0_i32 = arith.constant 0 : i32
    %c0_i32_0 = arith.constant 0 : i32
    return %c0_i32, %arg0 : i32, i32
  }
}

module attributes {stable_mosaic.version = 11 : i64} {
  func.func @_regressor_kernel(%arg0: i32, %arg1: memref<2x256xf32, #tpu.memory_space<vmem>>, %arg2: memref<256x128xf32, #tpu.memory_space<vmem>>, %arg3: memref<1x128xf32, #tpu.memory_space<vmem>>, %arg4: memref<128x128xf32, #tpu.memory_space<vmem>>, %arg5: memref<1x128xf32, #tpu.memory_space<vmem>>, %arg6: memref<128x1xf32, #tpu.memory_space<vmem>>, %arg7: memref<1x1xf32, #tpu.memory_space<vmem>>, %arg8: memref<2x1xf32, #tpu.memory_space<vmem>>) attributes {dimension_semantics = [#tpu.dimension_semantics<arbitrary>], iteration_bounds = array<i64: 1>, scalar_prefetch = 0 : i64, scratch_operands = 0 : i64, tpu.core_type = #tpu.core_type<tc>, window_params = [{pipeline_mode = #tpu.pipeline_mode<synchronous>, transform_indices = @transform_0, window_bounds = array<i64: 2, 256>}, {pipeline_mode = #tpu.pipeline_mode<synchronous>, transform_indices = @transform_1, window_bounds = array<i64: 256, 128>}, {pipeline_mode = #tpu.pipeline_mode<synchronous>, transform_indices = @transform_2, window_bounds = array<i64: 1, 128>}, {pipeline_mode = #tpu.pipeline_mode<synchronous>, transform_indices = @transform_3, window_bounds = array<i64: 128, 128>}, {pipeline_mode = #tpu.pipeline_mode<synchronous>, transform_indices = @transform_4, window_bounds = array<i64: 1, 128>}, {pipeline_mode = #tpu.pipeline_mode<synchronous>, transform_indices = @transform_5, window_bounds = array<i64: 128, 1>}, {pipeline_mode = #tpu.pipeline_mode<synchronous>, transform_indices = @transform_6, window_bounds = array<i64: 1, 1>}, {pipeline_mode = #tpu.pipeline_mode<synchronous>, transform_indices = @transform_7, window_bounds = array<i64: 2, 1>}]} {
    %c0 = arith.constant 0 : index
    %c0_0 = arith.constant 0 : index
    %0 = vector.load %arg1[%c0, %c0_0] : memref<2x256xf32, #tpu.memory_space<vmem>>, vector<2x256xf32>
    %c0_1 = arith.constant 0 : index
    %c0_2 = arith.constant 0 : index
    %1 = vector.load %arg2[%c0_1, %c0_2] : memref<256x128xf32, #tpu.memory_space<vmem>>, vector<256x128xf32>
    %cst = arith.constant dense<0.000000e+00> : vector<2x128xf32>
    %2 = tpu.matmul %0, %1, %cst {dimension_numbers = #tpu.dot_dimension_numbers<[1], [0], [0], [1], [0, 0, 1, 1], [], []>} : vector<2x256xf32>, vector<256x128xf32>, vector<2x128xf32> -> vector<2x128xf32>
    %c0_3 = arith.constant 0 : index
    %c0_4 = arith.constant 0 : index
    %3 = vector.load %arg3[%c0_3, %c0_4] : memref<1x128xf32, #tpu.memory_space<vmem>>, vector<1x128xf32>
    %4 = vector.broadcast %3 : vector<1x128xf32> to vector<2x128xf32>
    %5 = arith.addf %2, %4 : vector<2x128xf32>
    %cst_5 = arith.constant 0.000000e+00 : f32
    %6 = vector.broadcast %cst_5 : f32 to vector<2x128xf32>
    %7 = arith.cmpf ogt, %5, %6 : vector<2x128xf32>
    %cst_6 = arith.constant 1.000000e-01 : f32
    %8 = vector.broadcast %cst_6 : f32 to vector<2x128xf32>
    %9 = arith.mulf %8, %5 : vector<2x128xf32>
    %10 = arith.select %7, %5, %9 : vector<2x128xi1>, vector<2x128xf32>
    %c0_7 = arith.constant 0 : index
    %c0_8 = arith.constant 0 : index
    %11 = vector.load %arg4[%c0_7, %c0_8] : memref<128x128xf32, #tpu.memory_space<vmem>>, vector<128x128xf32>
    %cst_9 = arith.constant dense<0.000000e+00> : vector<2x128xf32>
    %12 = tpu.matmul %10, %11, %cst_9 {dimension_numbers = #tpu.dot_dimension_numbers<[1], [0], [0], [1], [0, 0, 1, 1], [], []>} : vector<2x128xf32>, vector<128x128xf32>, vector<2x128xf32> -> vector<2x128xf32>
    %c0_10 = arith.constant 0 : index
    %c0_11 = arith.constant 0 : index
    %13 = vector.load %arg5[%c0_10, %c0_11] : memref<1x128xf32, #tpu.memory_space<vmem>>, vector<1x128xf32>
    %14 = vector.broadcast %13 : vector<1x128xf32> to vector<2x128xf32>
    %15 = arith.addf %12, %14 : vector<2x128xf32>
    %cst_12 = arith.constant 0.000000e+00 : f32
    %16 = vector.broadcast %cst_12 : f32 to vector<2x128xf32>
    %17 = arith.cmpf ogt, %15, %16 : vector<2x128xf32>
    %cst_13 = arith.constant 1.000000e-01 : f32
    %18 = vector.broadcast %cst_13 : f32 to vector<2x128xf32>
    %19 = arith.mulf %18, %15 : vector<2x128xf32>
    %20 = arith.select %17, %15, %19 : vector<2x128xi1>, vector<2x128xf32>
    %c0_14 = arith.constant 0 : index
    %c0_15 = arith.constant 0 : index
    %21 = vector.load %arg6[%c0_14, %c0_15] : memref<128x1xf32, #tpu.memory_space<vmem>>, vector<128x1xf32>
    %cst_16 = arith.constant dense<0.000000e+00> : vector<2x1xf32>
    %22 = tpu.matmul %20, %21, %cst_16 {dimension_numbers = #tpu.dot_dimension_numbers<[1], [0], [0], [1], [0, 0, 1, 1], [], []>} : vector<2x128xf32>, vector<128x1xf32>, vector<2x1xf32> -> vector<2x1xf32>
    %c0_17 = arith.constant 0 : index
    %c0_18 = arith.constant 0 : index
    %23 = vector.load %arg7[%c0_17, %c0_18] : memref<1x1xf32, #tpu.memory_space<vmem>>, vector<1x1xf32>
    %24 = vector.broadcast %23 : vector<1x1xf32> to vector<2x1xf32>
    %25 = arith.addf %22, %24 : vector<2x1xf32>
    %c0_19 = arith.constant 0 : index
    %c0_20 = arith.constant 0 : index
    %26 = vector.load %arg8[%c0_19, %c0_20] : memref<2x1xf32, #tpu.memory_space<vmem>>, vector<2x1xf32>
    tpu.vector_store %arg8[%c0_19, %c0_20], %25 {strides = array<i32>} : memref<2x1xf32, #tpu.memory_space<vmem>>, vector<2x1xf32>,
    return
  }
  func.func @transform_0(%arg0: i32) -> (i32, i32) {
    %c0_i32 = arith.constant 0 : i32
    %c0_i32_0 = arith.constant 0 : i32
    %c0_i32_1 = arith.constant 0 : i32
    return %c0_i32, %c0_i32_0 : i32, i32
  }
  func.func @transform_1(%arg0: i32) -> (i32, i32) {
    %c0_i32 = arith.constant 0 : i32
    %c0_i32_0 = arith.constant 0 : i32
    %c0_i32_1 = arith.constant 0 : i32
    return %c0_i32, %c0_i32_0 : i32, i32
  }
  func.func @transform_2(%arg0: i32) -> (i32, i32) {
    %c0_i32 = arith.constant 0 : i32
    %c0_i32_0 = arith.constant 0 : i32
    %c0_i32_1 = arith.constant 0 : i32
    return %c0_i32, %c0_i32_0 : i32, i32
  }
  func.func @transform_3(%arg0: i32) -> (i32, i32) {
    %c0_i32 = arith.constant 0 : i32
    %c0_i32_0 = arith.constant 0 : i32
    %c0_i32_1 = arith.constant 0 : i32
    return %c0_i32, %c0_i32_0 : i32, i32
  }
  func.func @transform_4(%arg0: i32) -> (i32, i32) {
    %c0_i32 = arith.constant 0 : i32
    %c0_i32_0 = arith.constant 0 : i32
    %c0_i32_1 = arith.constant 0 : i32
    return %c0_i32, %c0_i32_0 : i32, i32
  }
  func.func @transform_5(%arg0: i32) -> (i32, i32) {
    %c0_i32 = arith.constant 0 : i32
    %c0_i32_0 = arith.constant 0 : i32
    %c0_i32_1 = arith.constant 0 : i32
    return %c0_i32, %c0_i32_0 : i32, i32
  }
  func.func @transform_6(%arg0: i32) -> (i32, i32) {
    %c0_i32 = arith.constant 0 : i32
    %c0_i32_0 = arith.constant 0 : i32
    %c0_i32_1 = arith.constant 0 : i32
    return %c0_i32, %c0_i32_0 : i32, i32
  }
  func.func @transform_7(%arg0: i32) -> (i32, i32) {
    %c0_i32 = arith.constant 0 : i32
    %c0_i32_0 = arith.constant 0 : i32
    %c0_i32_1 = arith.constant 0 : i32
    return %c0_i32, %c0_i32_0 : i32, i32
  }
}

</mosaic_0001>

<llo_original>
// kernel: maple_iqa_forward.3
$region0: #{maple_iqa_forward.3}
  #allocation0 [shape = 'u32[]', space=smem, size = 0x4, offset = 0x4, fixed_abs, tag = 'smem constant byte address 0x4 - core index']
  #allocation1 [shape = 'u32[144,128]{1,0:T(1,128)}', space=vmem, size = 0x12000, scoped, tag = 'internal scratch']
  #allocation2 [shape = 'f32[1,1]{1,0:T(1,128)S(1)}', space=vmem, size = 0x200, scoped, tag = 'scoped memory for maple_iqa_forward.3']
  %s0 = inlined_call_operand.vmem [shape: f32[2,256], index: 0, kind: input, shape index: {}]
  %s1 = inlined_call_operand.vmem [shape: f32[256,128], index: 1, kind: input, shape index: {}]
  %s2 = inlined_call_operand.vmem [shape: f32[1,128], index: 2, kind: input, shape index: {}]
  %s3 = inlined_call_operand.vmem [shape: f32[128,128], index: 3, kind: input, shape index: {}]
  %s4 = inlined_call_operand.vmem [shape: f32[1,128], index: 4, kind: input, shape index: {}]
  %s5 = inlined_call_operand.vmem [shape: f32[128,1], index: 5, kind: input, shape index: {}]
  %s6 = inlined_call_operand.<no memory space> [shape: f32[1,1], index: 6, kind: input, shape index: {}]
  %s7 = inlined_call_operand.vmem [shape: f32[2,1], index: 7, kind: output, shape index: {}]
  %s8 = sld [smem:[#allocation0]]
  $region38: #{maple_iqa_forward.3} parent=0
    _
  %s10 = ssub.s32 1, %s8
  %s11 = scalar_select 0, %s10, %s8
  %v12 = vstv %s6
  %13 = vst [vmem:[#allocation2] sm:$0x1] %v12
  // Predicated region
  $region2: #{maple_iqa_forward.3} parent=0 // pred_check
    _
  $region3: #{maple_iqa_forward.3} parent=0 // pred_check_branch
    %15 = sbr.rel (0) target = $region5
  $region4: #{maple_iqa_forward.3} parent=0 // pred_region
    _
  $region5: #{maple_iqa_forward.3} parent=0 // pred_fallthru
    _
  // Predicated region
  $region6: #{maple_iqa_forward.3} parent=0 // pred_check
    _
  $region7: #{maple_iqa_forward.3} parent=0 // pred_check_branch
    %17 = sbr.rel (0) target = $region9
  $region8: #{maple_iqa_forward.3} parent=0 // pred_region
    _
  $region9: #{maple_iqa_forward.3} parent=0 // pred_fallthru
    _
  // Predicated region
  $region10: #{maple_iqa_forward.3} parent=0 // pred_check
    _
  $region11: #{maple_iqa_forward.3} parent=0 // pred_check_branch
    %19 = sbr.rel (0) target = $region13
  $region12: #{maple_iqa_forward.3} parent=0 // pred_region
    _
  $region13: #{maple_iqa_forward.3} parent=0 // pred_fallthru
    _
  // Predicated region
  $region14: #{maple_iqa_forward.3} parent=0 // pred_check
    _
  $region15: #{maple_iqa_forward.3} parent=0 // pred_check_branch
    %21 = sbr.rel (0) target = $region17
  $region16: #{maple_iqa_forward.3} parent=0 // pred_region
    _
  $region17: #{maple_iqa_forward.3} parent=0 // pred_fallthru
    _
  // Predicated region
  $region18: #{maple_iqa_forward.3} parent=0 // pred_check
    _
  $region19: #{maple_iqa_forward.3} parent=0 // pred_check_branch
    %23 = sbr.rel (0) target = $region21
  $region20: #{maple_iqa_forward.3} parent=0 // pred_region
    _
  $region21: #{maple_iqa_forward.3} parent=0 // pred_fallthru
    _
  // Predicated region
  $region22: #{maple_iqa_forward.3} parent=0 // pred_check
    _
  $region23: #{maple_iqa_forward.3} parent=0 // pred_check_branch
    %25 = sbr.rel (0) target = $region25
  $region24: #{maple_iqa_forward.3} parent=0 // pred_region
    _
  $region25: #{maple_iqa_forward.3} parent=0 // pred_fallthru
    _
  // Predicated region
  $region26: #{maple_iqa_forward.3} parent=0 // pred_check
    _
  $region27: #{maple_iqa_forward.3} parent=0 // pred_check_branch
    %27 = sbr.rel (0) target = $region29
  $region28: #{maple_iqa_forward.3} parent=0 // pred_region
    _
  $region29: #{maple_iqa_forward.3} parent=0 // pred_fallthru
    _
  %v28 = vld [vmem:[%s0] sm:$0xf]
  %v29 = vld [vmem:[%s1] sm:$0xff]
  %v30 = vld [vmem:[%s1 + $0x8] sm:$0xff]
  %v31 = vld [vmem:[%s1 + $0x10] sm:$0xff]
  %v32 = vld [vmem:[%s1 + $0x18] sm:$0xff]
  %v33 = vld [vmem:[%s1 + $0x20] sm:$0xff]
  %v34 = vld [vmem:[%s1 + $0x28] sm:$0xff]
  %v35 = vld [vmem:[%s1 + $0x30] sm:$0xff]
  %v36 = vld [vmem:[%s1 + $0x38] sm:$0xff]
  %v37 = vld [vmem:[%s1 + $0x40] sm:$0xff]
  %v38 = vld [vmem:[%s1 + $0x48] sm:$0xff]
  %v39 = vld [vmem:[%s1 + $0x50] sm:$0xff]
  %v40 = vld [vmem:[%s1 + $0x58] sm:$0xff]
  %v41 = vld [vmem:[%s1 + $0x60] sm:$0xff]
  %v42 = vld [vmem:[%s1 + $0x68] sm:$0xff]
  %v43 = vld [vmem:[%s1 + $0x70] sm:$0xff]
  %v44 = vld [vmem:[%s1 + $0x78] sm:$0xff]
  %v45 = vld [vmem:[%s1 + $0x80] sm:$0xff]
  %v46 = vld [vmem:[%s1 + $0x88] sm:$0xff]
  %v47 = vld [vmem:[%s1 + $0x90] sm:$0xff]
  %v48 = vld [vmem:[%s1 + $0x98] sm:$0xff]
  %v49 = vld [vmem:[%s1 + $0xa0] sm:$0xff]
  %v50 = vld [vmem:[%s1 + $0xa8] sm:$0xff]
  %v51 = vld [vmem:[%s1 + $0xb0] sm:$0xff]
  %v52 = vld [vmem:[%s1 + $0xb8] sm:$0xff]
  %v53 = vld [vmem:[%s1 + $0xc0] sm:$0xff]
  %v54 = vld [vmem:[%s1 + $0xc8] sm:$0xff]
  %v55 = vld [vmem:[%s1 + $0xd0] sm:$0xff]
  %v56 = vld [vmem:[%s1 + $0xd8] sm:$0xff]
  %v57 = vld [vmem:[%s1 + $0xe0] sm:$0xff]
  %v58 = vld [vmem:[%s1 + $0xe8] sm:$0xff]
  %v59 = vld [vmem:[%s1 + $0xf0] sm:$0xff]
  %v60 = vld [vmem:[%s1 + $0xf8] sm:$0xff]
  %v61 = vld [vmem:[%s2] sm:$0x1]
  %v63 = vlaneseq
  %v64 = vshrl.u32 %v63, 7
  %v65 = vsub.s32 0, %v64
  %v66 = vrot.slane %v61, %v65
  %v70 = vunpack.c.l.s4 1983009808
  %v71 = vunpack.c.0.s8 %v70
  %v72 = vlaneseq
  %v73 = vshrl.u32 %v72, 7
  %v74 = vsub.s32 %v71, %v73
  %v75 = vrot.slane %v28, %v74
  %v76 = vcombine.high %v75, %v75
  %79 = vmatprep.subr.mxu0 0.0
  %80 = vmatpush1.msra.mxu0 %v44
  %81 = vmatprep.subr.mxu0 0.0
  %82 = vmatpush1.msra.mxu0 %v43
  %83 = vmatprep.subr.mxu0 0.0
  %84 = vmatpush1.msra.mxu0 %v42
  %85 = vmatprep.subr.mxu0 0.0
  %86 = vmatpush1.msra.mxu0 %v41
  %87 = vmatprep.subr.mxu0 0.0
  %88 = vmatpush1.msra.mxu0 %v40
  %89 = vmatprep.subr.mxu0 0.0
  %90 = vmatpush1.msra.mxu0 %v39
  %91 = vmatprep.subr.mxu0 0.0
  %92 = vmatpush1.msra.mxu0 %v38
  %93 = vmatprep.subr.mxu0 0.0
  %94 = vmatpush1.msra.mxu0 %v37
  %95 = vmatprep.subr.mxu0 0.0
  %96 = vmatpush1.msra.mxu0 %v36
  %97 = vmatprep.subr.mxu0 0.0
  %98 = vmatpush1.msra.mxu0 %v35
  %99 = vmatprep.subr.mxu0 0.0
  %100 = vmatpush1.msra.mxu0 %v34
  %101 = vmatprep.subr.mxu0 0.0
  %102 = vmatpush1.msra.mxu0 %v33
  %103 = vmatprep.subr.mxu0 0.0
  %104 = vmatpush1.msra.mxu0 %v32
  %105 = vmatprep.subr.mxu0 0.0
  %106 = vmatpush1.msra.mxu0 %v31
  %107 = vmatprep.subr.mxu0 0.0
  %108 = vmatpush1.msra.mxu0 %v30
  %109 = vmatprep.subr.mxu0 0.0
  %110 = vmatpush1.msra.mxu0 %v29
  %111 = vmatprep.subr.mxu0 0.0
  %112 = vmatpush2.msra.mxu0 %v60
  %113 = vmatprep.subr.mxu0 0.0
  %114 = vmatpush2.msra.mxu0 %v59
  %115 = vmatprep.subr.mxu0 0.0
  %116 = vmatpush2.msra.mxu0 %v58
  %117 = vmatprep.subr.mxu0 0.0
  %118 = vmatpush2.msra.mxu0 %v57
  %119 = vmatprep.subr.mxu0 0.0
  %120 = vmatpush2.msra.mxu0 %v56
  %121 = vmatprep.subr.mxu0 0.0
  %122 = vmatpush2.msra.mxu0 %v55
  %123 = vmatprep.subr.mxu0 0.0
  %124 = vmatpush2.msra.mxu0 %v54
  %125 = vmatprep.subr.mxu0 0.0
  %126 = vmatpush2.msra.mxu0 %v53
  %127 = vmatprep.subr.mxu0 0.0
  %128 = vmatpush2.msra.mxu0 %v52
  %129 = vmatprep.subr.mxu0 0.0
  %130 = vmatpush2.msra.mxu0 %v51
  %131 = vmatprep.subr.mxu0 0.0
  %132 = vmatpush2.msra.mxu0 %v50
  %133 = vmatprep.subr.mxu0 0.0
  %134 = vmatpush2.msra.mxu0 %v49
  %135 = vmatprep.subr.mxu0 0.0
  %136 = vmatpush2.msra.mxu0 %v48
  %137 = vmatprep.subr.mxu0 0.0
  %138 = vmatpush2.msra.mxu0 %v47
  %139 = vmatprep.subr.mxu0 0.0
  %140 = vmatpush2.msra.mxu0 %v46
  %141 = vmatprep.subr.mxu0 0.0
  %142 = vmatpush2.msra.mxu0 %v45
  %143 = vmatprep.mubr.f32.mxu0 %v76
  %144 = vmatmul.mubr.f32.gmra.mxu0 %v75
  %v145 = vpop.f32.mrf.mxu0
  %v146 = vadd.f32 %v66, %v145
  %v147 = vpop.f32.mrf.mxu0
  %148 = vdwg.mxu0
  %vm149 = vcmp.gt.f32.partialorder %v146, 0.0
  %v150 = vmul.f32 %v146, 0.1
  %v151 = vsel %vm149, %v146, %v150
  %v152 = vld [vmem:[%s3] sm:$0xff]
  %v153 = vld [vmem:[%s3 + $0x8] sm:$0xff]
  %v154 = vld [vmem:[%s3 + $0x10] sm:$0xff]
  %v155 = vld [vmem:[%s3 + $0x18] sm:$0xff]
  %v156 = vld [vmem:[%s3 + $0x20] sm:$0xff]
  %v157 = vld [vmem:[%s3 + $0x28] sm:$0xff]
  %v158 = vld [vmem:[%s3 + $0x30] sm:$0xff]
  %v159 = vld [vmem:[%s3 + $0x38] sm:$0xff]
  %v160 = vld [vmem:[%s3 + $0x40] sm:$0xff]
  %v161 = vld [vmem:[%s3 + $0x48] sm:$0xff]
  %v162 = vld [vmem:[%s3 + $0x50] sm:$0xff]
  %v163 = vld [vmem:[%s3 + $0x58] sm:$0xff]
  %v164 = vld [vmem:[%s3 + $0x60] sm:$0xff]
  %v165 = vld [vmem:[%s3 + $0x68] sm:$0xff]
  %v166 = vld [vmem:[%s3 + $0x70] sm:$0xff]
  %v167 = vld [vmem:[%s3 + $0x78] sm:$0xff]
  %v168 = vld [vmem:[%s4] sm:$0x1]
  %v170 = vlaneseq
  %v171 = vshrl.u32 %v170, 7
  %v172 = vsub.s32 0, %v171
  %v173 = vrot.slane %v168, %v172
  %175 = vmatprep.subr.mxu0 0.0
  %176 = vmatpush1.msra.mxu0 %v167
  %177 = vmatprep.subr.mxu0 0.0
  %178 = vmatpush1.msra.mxu0 %v166
  %179 = vmatprep.subr.mxu0 0.0
  %180 = vmatpush1.msra.mxu0 %v165
  %181 = vmatprep.subr.mxu0 0.0
  %182 = vmatpush1.msra.mxu0 %v164
  %183 = vmatprep.subr.mxu0 0.0
  %184 = vmatpush1.msra.mxu0 %v163
  %185 = vmatprep.subr.mxu0 0.0
  %186 = vmatpush1.msra.mxu0 %v162
  %187 = vmatprep.subr.mxu0 0.0
  %188 = vmatpush1.msra.mxu0 %v161
  %189 = vmatprep.subr.mxu0 0.0
  %190 = vmatpush1.msra.mxu0 %v160
  %191 = vmatprep.subr.mxu0 0.0
  %192 = vmatpush1.msra.mxu0 %v159
  %193 = vmatprep.subr.mxu0 0.0
  %194 = vmatpush1.msra.mxu0 %v158
  %195 = vmatprep.subr.mxu0 0.0
  %196 = vmatpush1.msra.mxu0 %v157
  %197 = vmatprep.subr.mxu0 0.0
  %198 = vmatpush1.msra.mxu0 %v156
  %199 = vmatprep.subr.mxu0 0.0
  %200 = vmatpush1.msra.mxu0 %v155
  %201 = vmatprep.subr.mxu0 0.0
  %202 = vmatpush1.msra.mxu0 %v154
  %203 = vmatprep.subr.mxu0 0.0
  %204 = vmatpush1.msra.mxu0 %v153
  %205 = vmatprep.subr.mxu0 0.0
  %206 = vmatpush1.msra.mxu0 %v152
  %207 = vmatprep.subr.mxu0 0.0
  %208 = vmatpush2.msra.mxu0 0.0
  %209 = vmatprep.subr.mxu0 0.0
  %210 = vmatpush2.msra.mxu0 0.0
  %211 = vmatprep.subr.mxu0 0.0
  %212 = vmatpush2.msra.mxu0 0.0
  %213 = vmatprep.subr.mxu0 0.0
  %214 = vmatpush2.msra.mxu0 0.0
  %215 = vmatprep.subr.mxu0 0.0
  %216 = vmatpush2.msra.mxu0 0.0
  %217 = vmatprep.subr.mxu0 0.0
  %218 = vmatpush2.msra.mxu0 0.0
  %219 = vmatprep.subr.mxu0 0.0
  %220 = vmatpush2.msra.mxu0 0.0
  %221 = vmatprep.subr.mxu0 0.0
  %222 = vmatpush2.msra.mxu0 0.0
  %223 = vmatprep.subr.mxu0 0.0
  %224 = vmatpush2.msra.mxu0 0.0
  %225 = vmatprep.subr.mxu0 0.0
  %226 = vmatpush2.msra.mxu0 0.0
  %227 = vmatprep.subr.mxu0 0.0
  %228 = vmatpush2.msra.mxu0 0.0
  %229 = vmatprep.subr.mxu0 0.0
  %230 = vmatpush2.msra.mxu0 0.0
  %231 = vmatprep.subr.mxu0 0.0
  %232 = vmatpush2.msra.mxu0 0.0
  %233 = vmatprep.subr.mxu0 0.0
  %234 = vmatpush2.msra.mxu0 0.0
  %235 = vmatprep.subr.mxu0 0.0
  %236 = vmatpush2.msra.mxu0 0.0
  %237 = vmatprep.subr.mxu0 0.0
  %238 = vmatpush2.msra.mxu0 0.0
  %239 = vmatprep.mubr.f32.mxu0 0.0
  %240 = vmatmul.mubr.f32.gmra.mxu0 %v151
  %v241 = vpop.f32.mrf.mxu0
  %v242 = vadd.f32 %v173, %v241
  %v243 = vpop.f32.mrf.mxu0
  %244 = vdwg.mxu0
  %vm245 = vcmp.gt.f32.partialorder %v242, 0.0
  %v246 = vmul.f32 %v242, 0.1
  %v247 = vsel %vm245, %v242, %v246
  %v248 = vld [vmem:[%s5] sm:$0xff]
  %v249 = vld [vmem:[%s5 + $0x8] sm:$0xff]
  %v250 = vld [vmem:[%s5 + $0x10] sm:$0xff]
  %v251 = vld [vmem:[%s5 + $0x18] sm:$0xff]
  %v252 = vld [vmem:[%s5 + $0x20] sm:$0xff]
  %v253 = vld [vmem:[%s5 + $0x28] sm:$0xff]
  %v254 = vld [vmem:[%s5 + $0x30] sm:$0xff]
  %v255 = vld [vmem:[%s5 + $0x38] sm:$0xff]
  %v256 = vld [vmem:[%s5 + $0x40] sm:$0xff]
  %v257 = vld [vmem:[%s5 + $0x48] sm:$0xff]
  %v258 = vld [vmem:[%s5 + $0x50] sm:$0xff]
  %v259 = vld [vmem:[%s5 + $0x58] sm:$0xff]
  %v260 = vld [vmem:[%s5 + $0x60] sm:$0xff]
  %v261 = vld [vmem:[%s5 + $0x68] sm:$0xff]
  %v262 = vld [vmem:[%s5 + $0x70] sm:$0xff]
  %v263 = vld [vmem:[%s5 + $0x78] sm:$0xff]
  %v264 = vld [vmem:[#allocation2] sm:$0x1]
  %v266 = vlaneseq
  %v267 = vshrl.u32 %v266, 7
  %v268 = vsub.s32 0, %v267
  %v269 = vrot.slane %v264, %v268
  %271 = vmatprep.subr.mxu0 0.0
  %272 = vmatpush1.msra.mxu0 %v263
  %273 = vmatprep.subr.mxu0 0.0
  %274 = vmatpush1.msra.mxu0 %v262
  %275 = vmatprep.subr.mxu0 0.0
  %276 = vmatpush1.msra.mxu0 %v261
  %277 = vmatprep.subr.mxu0 0.0
  %278 = vmatpush1.msra.mxu0 %v260
  %279 = vmatprep.subr.mxu0 0.0
  %280 = vmatpush1.msra.mxu0 %v259
  %281 = vmatprep.subr.mxu0 0.0
  %282 = vmatpush1.msra.mxu0 %v258
  %283 = vmatprep.subr.mxu0 0.0
  %284 = vmatpush1.msra.mxu0 %v257
  %285 = vmatprep.subr.mxu0 0.0
  %286 = vmatpush1.msra.mxu0 %v256
  %287 = vmatprep.subr.mxu0 0.0
  %288 = vmatpush1.msra.mxu0 %v255
  %289 = vmatprep.subr.mxu0 0.0
  %290 = vmatpush1.msra.mxu0 %v254
  %291 = vmatprep.subr.mxu0 0.0
  %292 = vmatpush1.msra.mxu0 %v253
  %293 = vmatprep.subr.mxu0 0.0
  %294 = vmatpush1.msra.mxu0 %v252
  %295 = vmatprep.subr.mxu0 0.0
  %296 = vmatpush1.msra.mxu0 %v251
  %297 = vmatprep.subr.mxu0 0.0
  %298 = vmatpush1.msra.mxu0 %v250
  %299 = vmatprep.subr.mxu0 0.0
  %300 = vmatpush1.msra.mxu0 %v249
  %301 = vmatprep.subr.mxu0 0.0
  %302 = vmatpush1.msra.mxu0 %v248
  %303 = vmatprep.subr.mxu0 0.0
  %304 = vmatpush2.msra.mxu0 0.0
  %305 = vmatprep.subr.mxu0 0.0
  %306 = vmatpush2.msra.mxu0 0.0
  %307 = vmatprep.subr.mxu0 0.0
  %308 = vmatpush2.msra.mxu0 0.0
  %309 = vmatprep.subr.mxu0 0.0
  %310 = vmatpush2.msra.mxu0 0.0
  %311 = vmatprep.subr.mxu0 0.0
  %312 = vmatpush2.msra.mxu0 0.0
  %313 = vmatprep.subr.mxu0 0.0
  %314 = vmatpush2.msra.mxu0 0.0
  %315 = vmatprep.subr.mxu0 0.0
  %316 = vmatpush2.msra.mxu0 0.0
  %317 = vmatprep.subr.mxu0 0.0
  %318 = vmatpush2.msra.mxu0 0.0
  %319 = vmatprep.subr.mxu0 0.0
  %320 = vmatpush2.msra.mxu0 0.0
  %321 = vmatprep.subr.mxu0 0.0
  %322 = vmatpush2.msra.mxu0 0.0
  %323 = vmatprep.subr.mxu0 0.0
  %324 = vmatpush2.msra.mxu0 0.0
  %325 = vmatprep.subr.mxu0 0.0
  %326 = vmatpush2.msra.mxu0 0.0
  %327 = vmatprep.subr.mxu0 0.0
  %328 = vmatpush2.msra.mxu0 0.0
  %329 = vmatprep.subr.mxu0 0.0
  %330 = vmatpush2.msra.mxu0 0.0
  %331 = vmatprep.subr.mxu0 0.0
  %332 = vmatpush2.msra.mxu0 0.0
  %333 = vmatprep.subr.mxu0 0.0
  %334 = vmatpush2.msra.mxu0 0.0
  %335 = vmatprep.mubr.f32.mxu0 0.0
  %336 = vmatmul.mubr.f32.gmra.mxu0 %v247
  %v337 = vpop.f32.mrf.mxu0
  %v338 = vadd.f32 %v269, %v337
  %v339 = vpop.f32.mrf.mxu0
  %340 = vdwg.mxu0
  %vm341 = vcmask 1024
  %342 = vst.msk [vmem:[%s7] sm:$0x3] %vm341, %v338
  // Predicated region
  $region30: #{maple_iqa_forward.3} parent=0 // pred_check
    _
  $region31: #{maple_iqa_forward.3} parent=0 // pred_check_branch
    %344 = sbr.rel (0) target = $region33
  $region32: #{maple_iqa_forward.3} parent=0 // pred_region
    _
  $region33: #{maple_iqa_forward.3} parent=0 // pred_fallthru
    _
  // Predicated region
  $region34: #{maple_iqa_forward.3} parent=0 // pred_check
    _
  $region35: #{maple_iqa_forward.3} parent=0 // pred_check_branch
    %346 = sbr.rel (0) target = $region37
  $region36: #{maple_iqa_forward.3} parent=0 // pred_region
    _
  $region37: #{maple_iqa_forward.3} parent=0 // pred_fallthru
    _

// kernel: maple_iqa_forward.2
$region0: #{maple_iqa_forward.2}
  #allocation0 [shape = 'u32[]', space=smem, size = 0x4, offset = 0x4, fixed_abs, tag = 'smem constant byte address 0x4 - core index']
  #allocation1 [shape = 'u32[144,128]{1,0:T(1,128)}', space=vmem, size = 0x12000, scoped, tag = 'internal scratch']
  #allocation2 [shape = 'f32[2,128]{1,0:T(2,128)}', space=vmem, size = 0x400, scoped, tag = 'scratch operand']
  #allocation3 [shape = 'f32[1]{0:T(128)S(6)}', space=smem, size = 0x200, scoped, tag = 'scoped memory for maple_iqa_forward.2']
  %s0 = inlined_call_operand.<no memory space> [shape: f32[1], index: 0, kind: input, shape index: {}]
  %s1 = inlined_call_operand.vmem [shape: bf16[2,1024], index: 1, kind: input, shape index: {}]
  %s2 = inlined_call_operand.hbm [shape: bf16[2,1024,128], index: 2, kind: input, shape index: {}]
  %s3 = inlined_call_operand.vmem [shape: f32[2,1,128], index: 3, kind: input, shape index: {}]
  %s4 = inlined_call_operand.vmem [shape: f32[2,256], index: 4, kind: output, shape index: {}]
  %s5 = sld [smem:[#allocation0]]
  $region61: #{maple_iqa_forward.2} parent=0
    _
  %s7 = ssub.s32 1, %s5
  %s8 = scalar_select 0, %s7, %s5
  %9 = sst [smem:[#allocation3]] %s0
  $region1: #{maple_iqa_forward.2} parent=0
    #allocation4 [shape = 'u8[524288]{0}', space=vmem, size = 0x80000, scoped, tag = 'input window, operand 2']
    #allocation5 [shape = 's32[2]{0}', space=sflag, size = 0x8, scoped, tag = 'scoped memory for maple_iqa_forward.2']
    %10 = vsyncpa [#allocation5], 0
    %s11 = scalar_lea.sflag [#allocation5], 1
    %12 = vsyncpa %s11, 0
    loop: start=0, step=1, limit=4
    $region2: #{maple_iqa_forward.2} parent=1 // loop_pre_header
      _
    $region3: #{maple_iqa_forward.2} parent=1 // loop_header
      %s14 = sphi 0, %s18
      %p15 = scmp.ge.s32.totalorder %s14, 4
      %s21 = sphi 0, %s33
      %s22 = sphi 0, %s29
      %s23 = sphi 0, %s21
      %s24 = sphi 0, %s22
      %s25 = sphi 0, %s23
      %s26 = sphi 0, %s24
      %s34 = sphi 0, %s34
      %s36 = sphi 0, %s34
      %s37 = sphi 0, %s36
      %s51 = sphi 0, %s37
      %s57 = sphi 0, %s59
      %s60 = sphi 0, %s57
      %s61 = sphi 0, %s60
      %s77 = sphi 0, %s61
      %s85 = sphi 0, %s87
      %s88 = sphi 0, %s85
      %s89 = sphi 0, %s88
      %s105 = sphi 0, %s89
      %s111 = sphi 0, %s113
      %s114 = sphi 0, %s111
      %s115 = sphi 0, %s114
      %s131 = sphi 0, %s115
      %s137 = sphi 0, %s139
      %s140 = sphi 0, %s137
      %s141 = sphi 0, %s140
      %s157 = sphi 0, %s141
    $region4: #{maple_iqa_forward.2} parent=1 // loop_header_branch
      %17 = sbr.rel (%p15) target = $region8
    $region5: #{maple_iqa_forward.2} parent=1 // loop_body
      %s19 = ssub.s32 %s14, 1
      %s20 = ssub.s32 %s14, 2
      %s27 = sadd.s32 1, %s22
      %p28 = scmp.ge.s32.totalorder %s27, 1
      %s29 = scalar_select %p28, 0, %s27
      %s30 = sadd.s32 1, %s21
      %s31 = scalar_select %p28, %s30, %s21
      %p32 = scmp.ge.s32.totalorder %s31, 2
      %s33 = scalar_select %p32, 0, %s31
      %s35 = sadd.s32 %s34, 1
      %p38 = scmp.eq.s32.totalorder %s14, 1
      %p39 = scmp.ne.s32.totalorder %s34, %s36
      %p40 = scmp.eq.s32.totalorder %s14, 0
      %p41 = por %p39, %p40
      %p42 = scmp.ne.s32.totalorder %s34, %s36
      %p43 = scmp.eq.s32.totalorder %s19, 1
      %p44 = por %p42, %p43
      %p45 = scmp.ne.s32.totalorder %s36, %s37
      %p46 = scmp.eq.s32.totalorder %s19, 0
      %p47 = por %p45, %p46
      %p48 = scmp.ne.s32.totalorder %s36, %s37
      %p49 = scmp.eq.s32.totalorder %s20, 1
      %p50 = por %p48, %p49
      %p52 = scmp.ne.s32.totalorder %s37, %s51
      %p53 = scmp.eq.s32.totalorder %s20, 0
      %p54 = por %p52, %p53
      %s55 = ssub.s32 %s22, %s29
      %p56 = scmp.eq.s32.totalorder %s55, 0
      %s58 = sadd.s32 %s57, 1
      %s59 = scalar_select %p56, %s57, %s58
      %p62 = pneg %p56
      %p63 = scmp.eq.s32.totalorder %s14, 1
      %p64 = por %p62, %p63
      %p65 = scmp.ne.s32.totalorder %s57, %s60
      %p66 = scmp.eq.s32.totalorder %s14, 0
      %p67 = por %p65, %p66
      %p68 = scmp.ne.s32.totalorder %s57, %s60
      %p69 = scmp.eq.s32.totalorder %s19, 1
      %p70 = por %p68, %p69
      %p71 = scmp.ne.s32.totalorder %s60, %s61
      %p72 = scmp.eq.s32.totalorder %s19, 0
      %p73 = por %p71, %p72
      %p74 = scmp.ne.s32.totalorder %s60, %s61
      %p75 = scmp.eq.s32.totalorder %s20, 1
      %p76 = por %p74, %p75
      %p78 = scmp.ne.s32.totalorder %s61, %s77
      %p79 = scmp.eq.s32.totalorder %s20, 0
      %p80 = por %p78, %p79
      %s81 = ssub.s32 %s21, %s33
      %s82 = ssub.s32 %s22, %s29
      %s83 = sor.u32 %s81, %s82
      %p84 = scmp.eq.s32.totalorder %s83, 0
      %s86 = sadd.s32 %s85, 1
      %s87 = scalar_select %p84, %s85, %s86
      %p90 = pneg %p84
      %p91 = scmp.eq.s32.totalorder %s14, 1
      %p92 = por %p90, %p91
      %p93 = scmp.ne.s32.totalorder %s85, %s88
      %p94 = scmp.eq.s32.totalorder %s14, 0
      %p95 = por %p93, %p94
      %p96 = scmp.ne.s32.totalorder %s85, %s88
      %p97 = scmp.eq.s32.totalorder %s19, 1
      %p98 = por %p96, %p97
      %p99 = scmp.ne.s32.totalorder %s88, %s89
      %p100 = scmp.eq.s32.totalorder %s19, 0
      %p101 = por %p99, %p100
      %p102 = scmp.ne.s32.totalorder %s88, %s89
      %p103 = scmp.eq.s32.totalorder %s20, 1
      %p104 = por %p102, %p103
      %p106 = scmp.ne.s32.totalorder %s89, %s105
      %p107 = scmp.eq.s32.totalorder %s20, 0
      %p108 = por %p106, %p107
      %s109 = ssub.s32 %s21, %s33
      %p110 = scmp.eq.s32.totalorder %s109, 0
      %s112 = sadd.s32 %s111, 1
      %s113 = scalar_select %p110, %s111, %s112
      %p116 = pneg %p110
      %p117 = scmp.eq.s32.totalorder %s14, 1
      %p118 = por %p116, %p117
      %p119 = scmp.ne.s32.totalorder %s111, %s114
      %p120 = scmp.eq.s32.totalorder %s14, 0
      %p121 = por %p119, %p120
      %p122 = scmp.ne.s32.totalorder %s111, %s114
      %p123 = scmp.eq.s32.totalorder %s19, 1
      %p124 = por %p122, %p123
      %p125 = scmp.ne.s32.totalorder %s114, %s115
      %p126 = scmp.eq.s32.totalorder %s19, 0
      %p127 = por %p125, %p126
      %p128 = scmp.ne.s32.totalorder %s114, %s115
      %p129 = scmp.eq.s32.totalorder %s20, 1
      %p130 = por %p128, %p129
      %p132 = scmp.ne.s32.totalorder %s115, %s131
      %p133 = scmp.eq.s32.totalorder %s20, 0
      %p134 = por %p132, %p133
      %s135 = ssub.s32 %s21, %s33
      %p136 = scmp.eq.s32.totalorder %s135, 0
      %s138 = sadd.s32 %s137, 1
      %s139 = scalar_select %p136, %s137, %s138
      %p142 = pneg %p136
      %p143 = scmp.eq.s32.totalorder %s14, 1
      %p144 = por %p142, %p143
      %p145 = scmp.ne.s32.totalorder %s137, %s140
      %p146 = scmp.eq.s32.totalorder %s14, 0
      %p147 = por %p145, %p146
      %p148 = scmp.ne.s32.totalorder %s137, %s140
      %p149 = scmp.eq.s32.totalorder %s19, 1
      %p150 = por %p148, %p149
      %p151 = scmp.ne.s32.totalorder %s140, %s141
      %p152 = scmp.eq.s32.totalorder %s19, 0
      %p153 = por %p151, %p152
      %p154 = scmp.ne.s32.totalorder %s140, %s141
      %p155 = scmp.eq.s32.totalorder %s20, 1
      %p156 = por %p154, %p155
      %p158 = scmp.ne.s32.totalorder %s141, %s157
      %p159 = scmp.eq.s32.totalorder %s20, 0
      %p160 = por %p158, %p159
      %p161 = scmp.le.s32.totalorder 1, %s14
      %p162 = scmp.lt.s32.totalorder %s14, 3
      %p163 = pnand %p161, %p162
      %p164 = pneg %p163
      // Predicated region
      $region9: #{maple_iqa_forward.2} parent=5 // pred_check
        _
      $region10: #{maple_iqa_forward.2} parent=5 // pred_check_branch
        %166 = sbr.rel (%p163) target = $region12
      $region11: #{maple_iqa_forward.2} parent=5 // pred_region
        %s167 = ssub.s32 %s14, 1
        // Predicated region
        $region13: #{maple_iqa_forward.2} parent=11 // pred_check
          %p168 = pneg %p47
        $region14: #{maple_iqa_forward.2} parent=11 // pred_check_branch
          %170 = sbr.rel (%p168) target = $region16
        $region15: #{maple_iqa_forward.2} parent=11 // pred_region
          _
        $region16: #{maple_iqa_forward.2} parent=11 // pred_fallthru
          _
        // Predicated region
        $region17: #{maple_iqa_forward.2} parent=11 // pred_check
          %p171 = pneg %p73
        $region18: #{maple_iqa_forward.2} parent=11 // pred_check_branch
          %173 = sbr.rel (%p171) target = $region20
        $region19: #{maple_iqa_forward.2} parent=11 // pred_region
          %s174 = smul.u32 8, %s24
          %p175 = scmp.lt.s32.totalorder %s174, 7
          %s176 = scalar_select %p175, %s174, 7
          %s177 = scalar_lea.vmem %s1, %s176
          %s178 = smul.u32 8, %s24
        $region20: #{maple_iqa_forward.2} parent=11 // pred_fallthru
          _
      $region12: #{maple_iqa_forward.2} parent=5 // pred_fallthru
        _
      %p179 = scmp.lt.s32.totalorder %s14, 2
      // Predicated region
      $region21: #{maple_iqa_forward.2} parent=5 // pred_check
        %p180 = pneg %p179
      $region22: #{maple_iqa_forward.2} parent=5 // pred_check_branch
        %182 = sbr.rel (%p180) target = $region24
      $region23: #{maple_iqa_forward.2} parent=5 // pred_region
        // Predicated region
        $region25: #{maple_iqa_forward.2} parent=23 // pred_check
          %p183 = pneg %p95
        $region26: #{maple_iqa_forward.2} parent=23 // pred_check_branch
          %185 = sbr.rel (%p183) target = $region28
        $region27: #{maple_iqa_forward.2} parent=23 // pred_region
          %s186 = sand.u32 %s85, 1
          %s187 = scalar_lea.sflag [#allocation5], %s186
          %s188 = sand.u32 %s85, 1
          %s189 = smul.addr %s188, 512
          %s190 = scalar_lea.vmem [#allocation4], %s189
          %s191 = smul.u32 128, %s22
          %s193 = ssub.s32 8192, 8192
          %194 = vsyncadd %s187, %s193
          %s195 = smul.addr %s21, 128
          %s196 = sadd.s32 %s191, %s195
          %s197 = smul.addr %s196, 64
          %s198 = scalar_lea.hbm %s2, %s197
          %s199 = sshll.u32 %s190, 4
          %s200 = int_to_ptr.vmem [resolvable:$true] %s199
          %205 = dma.hbm_to_vmem [thread:$0]  %s198, 8192, %s200, %s187, 64, 64, 4
        $region28: #{maple_iqa_forward.2} parent=23 // pred_fallthru
          _
        // Predicated region
        $region29: #{maple_iqa_forward.2} parent=23 // pred_check
          %p206 = pneg %p121
        $region30: #{maple_iqa_forward.2} parent=23 // pred_check_branch
          %208 = sbr.rel (%p206) target = $region32
        $region31: #{maple_iqa_forward.2} parent=23 // pred_region
          %p209 = scmp.lt.s32.totalorder %s21, 1
          %s210 = scalar_select %p209, %s21, 1
          %s211 = scalar_lea.vmem %s3, %s210
        $region32: #{maple_iqa_forward.2} parent=23 // pred_fallthru
          _
      $region24: #{maple_iqa_forward.2} parent=5 // pred_fallthru
        _
      %p212 = scmp.le.s32.totalorder 1, %s14
      %p213 = scmp.lt.s32.totalorder %s14, 3
      %p214 = pnand %p212, %p213
      %p215 = pneg %p214
      // Predicated region
      $region33: #{maple_iqa_forward.2} parent=5 // pred_check
        _
      $region34: #{maple_iqa_forward.2} parent=5 // pred_check_branch
        %217 = sbr.rel (%p214) target = $region36
      $region35: #{maple_iqa_forward.2} parent=5 // pred_region
        %s218 = ssub.s32 %s14, 1
        %s219 = sand.u32 %s88, 1
        %s220 = scalar_lea.sflag [#allocation5], %s219
        %s221 = sand.u32 %s88, 1
        %s222 = smul.addr %s221, 512
        %s223 = scalar_lea.vmem [#allocation4], %s222
        // Predicated region
        $region37: #{maple_iqa_forward.2} parent=35 // pred_check
          %p224 = pneg %p101
        $region38: #{maple_iqa_forward.2} parent=35 // pred_check_branch
          %226 = sbr.rel (%p224) target = $region40
        $region39: #{maple_iqa_forward.2} parent=35 // pred_region
          %227 = dma.done %s220, 8192
        $region40: #{maple_iqa_forward.2} parent=35 // pred_fallthru
          _
        %p228 = pneg %p47
        %p229 = pneg %p44
        %s230 = smul.u32 8, %s24
        %p231 = scmp.lt.s32.totalorder %s230, 7
        %s232 = scalar_select %p231, %s230, 7
        %s233 = scalar_lea.vmem %s1, %s232
        %p234 = pneg %p73
        %p235 = pneg %p70
        %s236 = sand.u32 %s88, 1
        %s237 = scalar_lea.sflag [#allocation5], %s236
        %s238 = sand.u32 %s88, 1
        %s239 = smul.addr %s238, 512
        %s240 = scalar_lea.vmem [#allocation4], %s239
        %p241 = pneg %p101
        %p242 = pneg %p98
        %p243 = scmp.lt.s32.totalorder %s23, 1
        %s244 = scalar_select %p243, %s23, 1
        %s245 = scalar_lea.vmem %s3, %s244
        %p246 = pneg %p127
        %p247 = pneg %p124
        %p248 = pneg %p153
        %p249 = pneg %p150
        %p250 = scmp.lt.s32.totalorder %s23, 1
        %s251 = scalar_select %p250, %s23, 1
        %s252 = smul.addr %s251, 2
        %s253 = scalar_lea.vmem %s4, %s252
        %s254 = smul.u32 8, %s24
        %p255 = scmp.lt.s32.totalorder %s254, 7
        %s256 = scalar_select %p255, %s254, 7
        %s257 = scalar_lea.vmem %s1, %s256
        %s258 = smul.u32 8, %s24
        %s259 = smul.u32 128, %s24
        %p260 = scmp.lt.s32.totalorder %s23, 1
        %s261 = scalar_select %p260, %s23, 1
        %s262 = scalar_lea.vmem %s3, %s261
        %p263 = scmp.lt.s32.totalorder %s23, 1
        %s264 = scalar_select %p263, %s23, 1
        %s265 = smul.addr %s264, 2
        %s266 = scalar_lea.vmem %s4, %s265
        %p268 = scmp.eq.s32.totalorder %s24, 0
        // Predicated region
        $region41: #{maple_iqa_forward.2} parent=35 // pred_check
          %p269 = pneg %p268
        $region42: #{maple_iqa_forward.2} parent=35 // pred_check_branch
          %271 = sbr.rel (%p269) target = $region44
        $region43: #{maple_iqa_forward.2} parent=35 // pred_region
          %272 = vst [vmem:[#allocation2] sm:$0x3] 0.0
        $region44: #{maple_iqa_forward.2} parent=35 // pred_fallthru
          _
        %v273 = vld [vmem:[#allocation2] sm:$0x3]
        %v274 = vld [vmem:[%s257] sm:$0xff]
        %v275 = vld [vmem:[%s223] sm:$0xf]
        %v276 = vld [vmem:[%s223 + $0x4] sm:$0xf]
        %v277 = vld [vmem:[%s223 + $0x8] sm:$0xf]
        %v278 = vld [vmem:[%s223 + $0xc] sm:$0xf]
        %v279 = vld [vmem:[%s223 + $0x10] sm:$0xf]
        %v280 = vld [vmem:[%s223 + $0x14] sm:$0xf]
        %v281 = vld [vmem:[%s223 + $0x18] sm:$0xf]
        %v282 = vld [vmem:[%s223 + $0x1c] sm:$0xf]
        %v283 = vld [vmem:[%s223 + $0x20] sm:$0xf]
        %v284 = vld [vmem:[%s223 + $0x24] sm:$0xf]
        %v285 = vld [vmem:[%s223 + $0x28] sm:$0xf]
        %v286 = vld [vmem:[%s223 + $0x2c] sm:$0xf]
        %v287 = vld [vmem:[%s223 + $0x30] sm:$0xf]
        %v288 = vld [vmem:[%s223 + $0x34] sm:$0xf]
        %v289 = vld [vmem:[%s223 + $0x38] sm:$0xf]
        %v290 = vld [vmem:[%s223 + $0x3c] sm:$0xf]
        %v291 = vld [vmem:[%s223 + $0x40] sm:$0xf]
        %v292 = vld [vmem:[%s223 + $0x44] sm:$0xf]
        %v293 = vld [vmem:[%s223 + $0x48] sm:$0xf]
        %v294 = vld [vmem:[%s223 + $0x4c] sm:$0xf]
        %v295 = vld [vmem:[%s223 + $0x50] sm:$0xf]
        %v296 = vld [vmem:[%s223 + $0x54] sm:$0xf]
        %v297 = vld [vmem:[%s223 + $0x58] sm:$0xf]
        %v298 = vld [vmem:[%s223 + $0x5c] sm:$0xf]
        %v299 = vld [vmem:[%s223 + $0x60] sm:$0xf]
        %v300 = vld [vmem:[%s223 + $0x64] sm:$0xf]
        %v301 = vld [vmem:[%s223 + $0x68] sm:$0xf]
        %v302 = vld [vmem:[%s223 + $0x6c] sm:$0xf]
        %v303 = vld [vmem:[%s223 + $0x70] sm:$0xf]
        %v304 = vld [vmem:[%s223 + $0x74] sm:$0xf]
        %v305 = vld [vmem:[%s223 + $0x78] sm:$0xf]
        %v306 = vld [vmem:[%s223 + $0x7c] sm:$0xf]
        %v307 = vld [vmem:[%s223 + $0x80] sm:$0xf]
        %v308 = vld [vmem:[%s223 + $0x84] sm:$0xf]
        %v309 = vld [vmem:[%s223 + $0x88] sm:$0xf]
        %v310 = vld [vmem:[%s223 + $0x8c] sm:$0xf]
        %v311 = vld [vmem:[%s223 + $0x90] sm:$0xf]
        %v312 = vld [vmem:[%s223 + $0x94] sm:$0xf]
        %v313 = vld [vmem:[%s223 + $0x98] sm:$0xf]
        %v314 = vld [vmem:[%s223 + $0x9c] sm:$0xf]
        %v315 = vld [vmem:[%s223 + $0xa0] sm:$0xf]
        %v316 = vld [vmem:[%s223 + $0xa4] sm:$0xf]
        %v317 = vld [vmem:[%s223 + $0xa8] sm:$0xf]
        %v318 = vld [vmem:[%s223 + $0xac] sm:$0xf]
        %v319 = vld [vmem:[%s223 + $0xb0] sm:$0xf]
        %v320 = vld [vmem:[%s223 + $0xb4] sm:$0xf]
        %v321 = vld [vmem:[%s223 + $0xb8] sm:$0xf]
        %v322 = vld [vmem:[%s223 + $0xbc] sm:$0xf]
        %v323 = vld [vmem:[%s223 + $0xc0] sm:$0xf]
        %v324 = vld [vmem:[%s223 + $0xc4] sm:$0xf]
        %v325 = vld [vmem:[%s223 + $0xc8] sm:$0xf]
        %v326 = vld [vmem:[%s223 + $0xcc] sm:$0xf]
        %v327 = vld [vmem:[%s223 + $0xd0] sm:$0xf]
        %v328 = vld [vmem:[%s223 + $0xd4] sm:$0xf]
        %v329 = vld [vmem:[%s223 + $0xd8] sm:$0xf]
        %v330 = vld [vmem:[%s223 + $0xdc] sm:$0xf]
        %v331 = vld [vmem:[%s223 + $0xe0] sm:$0xf]
        %v332 = vld [vmem:[%s223 + $0xe4] sm:$0xf]
        %v333 = vld [vmem:[%s223 + $0xe8] sm:$0xf]
        %v334 = vld [vmem:[%s223 + $0xec] sm:$0xf]
        %v335 = vld [vmem:[%s223 + $0xf0] sm:$0xf]
        %v336 = vld [vmem:[%s223 + $0xf4] sm:$0xf]
        %v337 = vld [vmem:[%s223 + $0xf8] sm:$0xf]
        %v338 = vld [vmem:[%s223 + $0xfc] sm:$0xf]
        %v339 = vld [vmem:[%s223 + $0x100] sm:$0xf]
        %v340 = vld [vmem:[%s223 + $0x104] sm:$0xf]
        %v341 = vld [vmem:[%s223 + $0x108] sm:$0xf]
        %v342 = vld [vmem:[%s223 + $0x10c] sm:$0xf]
        %v343 = vld [vmem:[%s223 + $0x110] sm:$0xf]
        %v344 = vld [vmem:[%s223 + $0x114] sm:$0xf]
        %v345 = vld [vmem:[%s223 + $0x118] sm:$0xf]
        %v346 = vld [vmem:[%s223 + $0x11c] sm:$0xf]
        %v347 = vld [vmem:[%s223 + $0x120] sm:$0xf]
        %v348 = vld [vmem:[%s223 + $0x124] sm:$0xf]
        %v349 = vld [vmem:[%s223 + $0x128] sm:$0xf]
        %v350 = vld [vmem:[%s223 + $0x12c] sm:$0xf]
        %v351 = vld [vmem:[%s223 + $0x130] sm:$0xf]
        %v352 = vld [vmem:[%s223 + $0x134] sm:$0xf]
        %v353 = vld [vmem:[%s223 + $0x138] sm:$0xf]
        %v354 = vld [vmem:[%s223 + $0x13c] sm:$0xf]
        %v355 = vld [vmem:[%s223 + $0x140] sm:$0xf]
        %v356 = vld [vmem:[%s223 + $0x144] sm:$0xf]
        %v357 = vld [vmem:[%s223 + $0x148] sm:$0xf]
        %v358 = vld [vmem:[%s223 + $0x14c] sm:$0xf]
        %v359 = vld [vmem:[%s223 + $0x150] sm:$0xf]
        %v360 = vld [vmem:[%s223 + $0x154] sm:$0xf]
        %v361 = vld [vmem:[%s223 + $0x158] sm:$0xf]
        %v362 = vld [vmem:[%s223 + $0x15c] sm:$0xf]
        %v363 = vld [vmem:[%s223 + $0x160] sm:$0xf]
        %v364 = vld [vmem:[%s223 + $0x164] sm:$0xf]
        %v365 = vld [vmem:[%s223 + $0x168] sm:$0xf]
        %v366 = vld [vmem:[%s223 + $0x16c] sm:$0xf]
        %v367 = vld [vmem:[%s223 + $0x170] sm:$0xf]
        %v368 = vld [vmem:[%s223 + $0x174] sm:$0xf]
        %v369 = vld [vmem:[%s223 + $0x178] sm:$0xf]
        %v370 = vld [vmem:[%s223 + $0x17c] sm:$0xf]
        %v371 = vld [vmem:[%s223 + $0x180] sm:$0xf]
        %v372 = vld [vmem:[%s223 + $0x184] sm:$0xf]
        %v373 = vld [vmem:[%s223 + $0x188] sm:$0xf]
        %v374 = vld [vmem:[%s223 + $0x18c] sm:$0xf]
        %v375 = vld [vmem:[%s223 + $0x190] sm:$0xf]
        %v376 = vld [vmem:[%s223 + $0x194] sm:$0xf]
        %v377 = vld [vmem:[%s223 + $0x198] sm:$0xf]
        %v378 = vld [vmem:[%s223 + $0x19c] sm:$0xf]
        %v379 = vld [vmem:[%s223 + $0x1a0] sm:$0xf]
        %v380 = vld [vmem:[%s223 + $0x1a4] sm:$0xf]
        %v381 = vld [vmem:[%s223 + $0x1a8] sm:$0xf]
        %v382 = vld [vmem:[%s223 + $0x1ac] sm:$0xf]
        %v383 = vld [vmem:[%s223 + $0x1b0] sm:$0xf]
        %v384 = vld [vmem:[%s223 + $0x1b4] sm:$0xf]
        %v385 = vld [vmem:[%s223 + $0x1b8] sm:$0xf]
        %v386 = vld [vmem:[%s223 + $0x1bc] sm:$0xf]
        %v387 = vld [vmem:[%s223 + $0x1c0] sm:$0xf]
        %v388 = vld [vmem:[%s223 + $0x1c4] sm:$0xf]
        %v389 = vld [vmem:[%s223 + $0x1c8] sm:$0xf]
        %v390 = vld [vmem:[%s223 + $0x1cc] sm:$0xf]
        %v391 = vld [vmem:[%s223 + $0x1d0] sm:$0xf]
        %v392 = vld [vmem:[%s223 + $0x1d4] sm:$0xf]
        %v393 = vld [vmem:[%s223 + $0x1d8] sm:$0xf]
        %v394 = vld [vmem:[%s223 + $0x1dc] sm:$0xf]
        %v395 = vld [vmem:[%s223 + $0x1e0] sm:$0xf]
        %v396 = vld [vmem:[%s223 + $0x1e4] sm:$0xf]
        %v397 = vld [vmem:[%s223 + $0x1e8] sm:$0xf]
        %v398 = vld [vmem:[%s223 + $0x1ec] sm:$0xf]
        %v399 = vld [vmem:[%s223 + $0x1f0] sm:$0xf]
        %v400 = vld [vmem:[%s223 + $0x1f4] sm:$0xf]
        %v401 = vld [vmem:[%s223 + $0x1f8] sm:$0xf]
        %v402 = vld [vmem:[%s223 + $0x1fc] sm:$0xf]
        %v404 = vcombine.high %v274, %v274
        %v406 = vunpack.c.l.s4 1966171168
        %v407 = vunpack.c.0.s8 %v406
        %v408 = vlaneseq
        %v409 = vshrl.u32 %v408, 7
        %v410 = vsub.s32 %v407, %v409
        %v411 = vrot.slane %v274, %v410
        %v413 = vunpack.c.l.s4 1966171168
        %v414 = vunpack.c.0.s8 %v413
        %v415 = vlaneseq
        %v416 = vshrl.u32 %v415, 7
        %v417 = vsub.s32 %v414, %v416
        %v418 = vrot.slane %v404, %v417
        %v419 = vcombine.high %v411, %v411
        %v420 = vcombine.high %v418, %v418
        %v422 = vunpack.c.l.s4 1966171168
        %v423 = vunpack.c.0.s8 %v422
        %v424 = vlaneseq
        %v425 = vshrl.u32 %v424, 7
        %v426 = vsub.s32 %v423, %v425
        %v427 = vrot.slane %v411, %v426
        %v429 = vunpack.c.l.s4 1966171168
        %v430 = vunpack.c.0.s8 %v429
        %v431 = vlaneseq
        %v432 = vshrl.u32 %v431, 7
        %v433 = vsub.s32 %v430, %v432
        %v434 = vrot.slane %v418, %v433
        %v436 = vunpack.c.l.s4 1966171168
        %v437 = vunpack.c.0.s8 %v436
        %v438 = vlaneseq
        %v439 = vshrl.u32 %v438, 7
        %v440 = vsub.s32 %v437, %v439
        %v441 = vrot.slane %v419, %v440
        %v443 = vunpack.c.l.s4 1966171168
        %v444 = vunpack.c.0.s8 %v443
        %v445 = vlaneseq
        %v446 = vshrl.u32 %v445, 7
        %v447 = vsub.s32 %v444, %v446
        %v448 = vrot.slane %v420, %v447
        %v449 = vcombine.high %v427, %v427
        %v450 = vcombine.high %v434, %v434
        %v451 = vcombine.high %v441, %v441
        %v452 = vcombine.high %v448, %v448
        %v589 = vunpack.c.l.b16 %v275
        %v590 = vunpack.c.l.b16 %v276
        %v591 = vunpack.c.l.b16 %v277
        %v592 = vunpack.c.l.b16 %v278
        %v593 = vunpack.c.l.b16 %v279
        %v594 = vunpack.c.l.b16 %v280
        %v595 = vunpack.c.l.b16 %v281
        %v596 = vunpack.c.l.b16 %v282
        %v597 = vunpack.c.l.b16 %v283
        %v598 = vunpack.c.l.b16 %v284
        %v599 = vunpack.c.l.b16 %v285
        %v600 = vunpack.c.l.b16 %v286
        %v601 = vunpack.c.l.b16 %v287
        %v602 = vunpack.c.l.b16 %v288
        %v603 = vunpack.c.l.b16 %v289
        %v604 = vunpack.c.l.b16 %v290
        %v605 = vunpack.c.l.b16 %v291
        %v606 = vunpack.c.l.b16 %v292
        %v607 = vunpack.c.l.b16 %v293
        %v608 = vunpack.c.l.b16 %v294
        %v609 = vunpack.c.l.b16 %v295
        %v610 = vunpack.c.l.b16 %v296
        %v611 = vunpack.c.l.b16 %v297
        %v612 = vunpack.c.l.b16 %v298
        %v613 = vunpack.c.l.b16 %v299
        %v614 = vunpack.c.l.b16 %v300
        %v615 = vunpack.c.l.b16 %v301
        %v616 = vunpack.c.l.b16 %v302
        %v617 = vunpack.c.l.b16 %v303
        %v618 = vunpack.c.l.b16 %v304
        %v619 = vunpack.c.l.b16 %v305
        %v620 = vunpack.c.l.b16 %v306
        %v621 = vunpack.c.l.b16 %v307
        %v622 = vunpack.c.l.b16 %v308
        %v623 = vunpack.c.l.b16 %v309
        %v624 = vunpack.c.l.b16 %v310
        %v625 = vunpack.c.l.b16 %v311
        %v626 = vunpack.c.l.b16 %v312
        %v627 = vunpack.c.l.b16 %v313
        %v628 = vunpack.c.l.b16 %v314
        %v629 = vunpack.c.l.b16 %v315
        %v630 = vunpack.c.l.b16 %v316
        %v631 = vunpack.c.l.b16 %v317
        %v632 = vunpack.c.l.b16 %v318
        %v633 = vunpack.c.l.b16 %v319
        %v634 = vunpack.c.l.b16 %v320
        %v635 = vunpack.c.l.b16 %v321
        %v636 = vunpack.c.l.b16 %v322
        %v637 = vunpack.c.l.b16 %v323
        %v638 = vunpack.c.l.b16 %v324
        %v639 = vunpack.c.l.b16 %v325
        %v640 = vunpack.c.l.b16 %v326
        %v641 = vunpack.c.l.b16 %v327
        %v642 = vunpack.c.l.b16 %v328
        %v643 = vunpack.c.l.b16 %v329
        %v644 = vunpack.c.l.b16 %v330
        %v645 = vunpack.c.l.b16 %v331
        %v646 = vunpack.c.l.b16 %v332
        %v647 = vunpack.c.l.b16 %v333
        %v648 = vunpack.c.l.b16 %v334
        %v649 = vunpack.c.l.b16 %v335
        %v650 = vunpack.c.l.b16 %v336
        %v651 = vunpack.c.l.b16 %v337
        %v652 = vunpack.c.l.b16 %v338
        %v653 = vunpack.c.l.b16 %v339
        %v654 = vunpack.c.l.b16 %v340
        %v655 = vunpack.c.l.b16 %v341
        %v656 = vunpack.c.l.b16 %v342
        %v657 = vunpack.c.l.b16 %v343
        %v658 = vunpack.c.l.b16 %v344
        %v659 = vunpack.c.l.b16 %v345
        %v660 = vunpack.c.l.b16 %v346
        %v661 = vunpack.c.l.b16 %v347
        %v662 = vunpack.c.l.b16 %v348
        %v663 = vunpack.c.l.b16 %v349
        %v664 = vunpack.c.l.b16 %v350
        %v665 = vunpack.c.l.b16 %v351
        %v666 = vunpack.c.l.b16 %v352
        %v667 = vunpack.c.l.b16 %v353
        %v668 = vunpack.c.l.b16 %v354
        %v669 = vunpack.c.l.b16 %v355
        %v670 = vunpack.c.l.b16 %v356
        %v671 = vunpack.c.l.b16 %v357
        %v672 = vunpack.c.l.b16 %v358
        %v673 = vunpack.c.l.b16 %v359
        %v674 = vunpack.c.l.b16 %v360
        %v675 = vunpack.c.l.b16 %v361
        %v676 = vunpack.c.l.b16 %v362
        %v677 = vunpack.c.l.b16 %v363
        %v678 = vunpack.c.l.b16 %v364
        %v679 = vunpack.c.l.b16 %v365
        %v680 = vunpack.c.l.b16 %v366
        %v681 = vunpack.c.l.b16 %v367
        %v682 = vunpack.c.l.b16 %v368
        %v683 = vunpack.c.l.b16 %v369
        %v684 = vunpack.c.l.b16 %v370
        %v685 = vunpack.c.l.b16 %v371
        %v686 = vunpack.c.l.b16 %v372
        %v687 = vunpack.c.l.b16 %v373
        %v688 = vunpack.c.l.b16 %v374
        %v689 = vunpack.c.l.b16 %v375
        %v690 = vunpack.c.l.b16 %v376
        %v691 = vunpack.c.l.b16 %v377
        %v692 = vunpack.c.l.b16 %v378
        %v693 = vunpack.c.l.b16 %v379
        %v694 = vunpack.c.l.b16 %v380
        %v695 = vunpack.c.l.b16 %v381
        %v696 = vunpack.c.l.b16 %v382
        %v697 = vunpack.c.l.b16 %v383
        %v698 = vunpack.c.l.b16 %v384
        %v699 = vunpack.c.l.b16 %v385
        %v700 = vunpack.c.l.b16 %v386
        %v701 = vunpack.c.l.b16 %v387
        %v702 = vunpack.c.l.b16 %v388
        %v703 = vunpack.c.l.b16 %v389
        %v704 = vunpack.c.l.b16 %v390
        %v705 = vunpack.c.l.b16 %v391
        %v706 = vunpack.c.l.b16 %v392
        %v707 = vunpack.c.l.b16 %v393
        %v708 = vunpack.c.l.b16 %v394
        %v709 = vunpack.c.l.b16 %v395
        %v710 = vunpack.c.l.b16 %v396
        %v711 = vunpack.c.l.b16 %v397
        %v712 = vunpack.c.l.b16 %v398
        %v713 = vunpack.c.l.b16 %v399
        %v714 = vunpack.c.l.b16 %v400
        %v715 = vunpack.c.l.b16 %v401
        %v716 = vunpack.c.l.b16 %v402
        %v717 = vpack.c.b16 %v590, %v589
        %v718 = vpack.c.b16 %v592, %v591
        %v719 = vpack.c.b16 %v594, %v593
        %v720 = vpack.c.b16 %v596, %v595
        %v721 = vpack.c.b16 %v598, %v597
        %v722 = vpack.c.b16 %v600, %v599
        %v723 = vpack.c.b16 %v602, %v601
        %v724 = vpack.c.b16 %v604, %v603
        %v725 = vpack.c.b16 %v606, %v605
        %v726 = vpack.c.b16 %v608, %v607
        %v727 = vpack.c.b16 %v610, %v609
        %v728 = vpack.c.b16 %v612, %v611
        %v729 = vpack.c.b16 %v614, %v613
        %v730 = vpack.c.b16 %v616, %v615
        %v731 = vpack.c.b16 %v618, %v617
        %v732 = vpack.c.b16 %v620, %v619
        %v733 = vpack.c.b16 %v622, %v621
        %v734 = vpack.c.b16 %v624, %v623
        %v735 = vpack.c.b16 %v626, %v625
        %v736 = vpack.c.b16 %v628, %v627
        %v737 = vpack.c.b16 %v630, %v629
        %v738 = vpack.c.b16 %v632, %v631
        %v739 = vpack.c.b16 %v634, %v633
        %v740 = vpack.c.b16 %v636, %v635
        %v741 = vpack.c.b16 %v638, %v637
        %v742 = vpack.c.b16 %v640, %v639
        %v743 = vpack.c.b16 %v642, %v641
        %v744 = vpack.c.b16 %v644, %v643
        %v745 = vpack.c.b16 %v646, %v645
        %v746 = vpack.c.b16 %v648, %v647
        %v747 = vpack.c.b16 %v650, %v649
        %v748 = vpack.c.b16 %v652, %v651
        %v749 = vpack.c.b16 %v654, %v653
        %v750 = vpack.c.b16 %v656, %v655
        %v751 = vpack.c.b16 %v658, %v657
        %v752 = vpack.c.b16 %v660, %v659
        %v753 = vpack.c.b16 %v662, %v661
        %v754 = vpack.c.b16 %v664, %v663
        %v755 = vpack.c.b16 %v666, %v665
        %v756 = vpack.c.b16 %v668, %v667
        %v757 = vpack.c.b16 %v670, %v669
        %v758 = vpack.c.b16 %v672, %v671
        %v759 = vpack.c.b16 %v674, %v673
        %v760 = vpack.c.b16 %v676, %v675
        %v761 = vpack.c.b16 %v678, %v677
        %v762 = vpack.c.b16 %v680, %v679
        %v763 = vpack.c.b16 %v682, %v681
        %v764 = vpack.c.b16 %v684, %v683
        %v765 = vpack.c.b16 %v686, %v685
        %v766 = vpack.c.b16 %v688, %v687
        %v767 = vpack.c.b16 %v690, %v689
        %v768 = vpack.c.b16 %v692, %v691
        %v769 = vpack.c.b16 %v694, %v693
        %v770 = vpack.c.b16 %v696, %v695
        %v771 = vpack.c.b16 %v698, %v697
        %v772 = vpack.c.b16 %v700, %v699
        %v773 = vpack.c.b16 %v702, %v701
        %v774 = vpack.c.b16 %v704, %v703
        %v775 = vpack.c.b16 %v706, %v705
        %v776 = vpack.c.b16 %v708, %v707
        %v777 = vpack.c.b16 %v710, %v709
        %v778 = vpack.c.b16 %v712, %v711
        %v779 = vpack.c.b16 %v714, %v713
        %v780 = vpack.c.b16 %v716, %v715
        %845 = vmatprep.subr.bf16.mxu0 0
        %846 = vmatpush1.bf16.msra.mxu0 %v724
        %847 = vmatprep.subr.bf16.mxu0 0
        %848 = vmatpush1.bf16.msra.mxu0 %v723
        %849 = vmatprep.subr.bf16.mxu0 0
        %850 = vmatpush1.bf16.msra.mxu0 %v722
        %851 = vmatprep.subr.bf16.mxu0 0
        %852 = vmatpush1.bf16.msra.mxu0 %v721
        %853 = vmatprep.subr.bf16.mxu0 0
        %854 = vmatpush1.bf16.msra.mxu0 %v720
        %855 = vmatprep.subr.bf16.mxu0 0
        %856 = vmatpush1.bf16.msra.mxu0 %v719
        %857 = vmatprep.subr.bf16.mxu0 0
        %858 = vmatpush1.bf16.msra.mxu0 %v718
        %859 = vmatprep.subr.bf16.mxu0 0
        %860 = vmatpush1.bf16.msra.mxu0 %v717
        %861 = vmatprep.subr.bf16.mxu0 0
        %862 = vmatpush2.bf16.msra.mxu0 %v732
        %863 = vmatprep.subr.bf16.mxu0 0
        %864 = vmatpush2.bf16.msra.mxu0 %v731
        %865 = vmatprep.subr.bf16.mxu0 0
        %866 = vmatpush2.bf16.msra.mxu0 %v730
        %867 = vmatprep.subr.bf16.mxu0 0
        %868 = vmatpush2.bf16.msra.mxu0 %v729
        %869 = vmatprep.subr.bf16.mxu0 0
        %870 = vmatpush2.bf16.msra.mxu0 %v728
        %871 = vmatprep.subr.bf16.mxu0 0
        %872 = vmatpush2.bf16.msra.mxu0 %v727
        %873 = vmatprep.subr.bf16.mxu0 0
        %874 = vmatpush2.bf16.msra.mxu0 %v726
        %875 = vmatprep.subr.bf16.mxu0 0
        %876 = vmatpush2.bf16.msra.mxu0 %v725
        %877 = vmatprep.mubr.bf16.mxu0 %v441
        %878 = vmatmul.mubr.bf16.gmra.mxu0 %v427
        %v879 = vpop.f32.mrf.mxu0
        %v880 = vadd.f32 0.0, %v879
        %v881 = vpop.f32.mrf.mxu0
        %v882 = vpop.f32.mrf.mxu0
        %v883 = vpop.f32.mrf.mxu0
        %884 = vdwg.mxu0
        %885 = vmatprep.subr.bf16.mxu0 0
        %886 = vmatpush1.bf16.msra.mxu0 %v740
        %887 = vmatprep.subr.bf16.mxu0 0
        %888 = vmatpush1.bf16.msra.mxu0 %v739
        %889 = vmatprep.subr.bf16.mxu0 0
        %890 = vmatpush1.bf16.msra.mxu0 %v738
        %891 = vmatprep.subr.bf16.mxu0 0
        %892 = vmatpush1.bf16.msra.mxu0 %v737
        %893 = vmatprep.subr.bf16.mxu0 0
        %894 = vmatpush1.bf16.msra.mxu0 %v736
        %895 = vmatprep.subr.bf16.mxu0 0
        %896 = vmatpush1.bf16.msra.mxu0 %v735
        %897 = vmatprep.subr.bf16.mxu0 0
        %898 = vmatpush1.bf16.msra.mxu0 %v734
        %899 = vmatprep.subr.bf16.mxu0 0
        %900 = vmatpush1.bf16.msra.mxu0 %v733
        %901 = vmatprep.subr.bf16.mxu0 0
        %902 = vmatpush2.bf16.msra.mxu0 %v748
        %903 = vmatprep.subr.bf16.mxu0 0
        %904 = vmatpush2.bf16.msra.mxu0 %v747
        %905 = vmatprep.subr.bf16.mxu0 0
        %906 = vmatpush2.bf16.msra.mxu0 %v746
        %907 = vmatprep.subr.bf16.mxu0 0
        %908 = vmatpush2.bf16.msra.mxu0 %v745
        %909 = vmatprep.subr.bf16.mxu0 0
        %910 = vmatpush2.bf16.msra.mxu0 %v744
        %911 = vmatprep.subr.bf16.mxu0 0
        %912 = vmatpush2.bf16.msra.mxu0 %v743
        %913 = vmatprep.subr.bf16.mxu0 0
        %914 = vmatpush2.bf16.msra.mxu0 %v742
        %915 = vmatprep.subr.bf16.mxu0 0
        %916 = vmatpush2.bf16.msra.mxu0 %v741
        %917 = vmatprep.mubr.bf16.mxu0 %v451
        %918 = vmatmul.mubr.bf16.gmra.mxu0 %v449
        %v919 = vpop.f32.mrf.mxu0
        %v920 = vadd.f32 %v880, %v919
        %v921 = vpop.f32.mrf.mxu0
        %v922 = vpop.f32.mrf.mxu0
        %v923 = vpop.f32.mrf.mxu0
        %924 = vdwg.mxu0
        %925 = vmatprep.subr.bf16.mxu0 0
        %926 = vmatpush1.bf16.msra.mxu0 %v756
        %927 = vmatprep.subr.bf16.mxu0 0
        %928 = vmatpush1.bf16.msra.mxu0 %v755
        %929 = vmatprep.subr.bf16.mxu0 0
        %930 = vmatpush1.bf16.msra.mxu0 %v754
        %931 = vmatprep.subr.bf16.mxu0 0
        %932 = vmatpush1.bf16.msra.mxu0 %v753
        %933 = vmatprep.subr.bf16.mxu0 0
        %934 = vmatpush1.bf16.msra.mxu0 %v752
        %935 = vmatprep.subr.bf16.mxu0 0
        %936 = vmatpush1.bf16.msra.mxu0 %v751
        %937 = vmatprep.subr.bf16.mxu0 0
        %938 = vmatpush1.bf16.msra.mxu0 %v750
        %939 = vmatprep.subr.bf16.mxu0 0
        %940 = vmatpush1.bf16.msra.mxu0 %v749
        %941 = vmatprep.subr.bf16.mxu0 0
        %942 = vmatpush2.bf16.msra.mxu0 %v764
        %943 = vmatprep.subr.bf16.mxu0 0
        %944 = vmatpush2.bf16.msra.mxu0 %v763
        %945 = vmatprep.subr.bf16.mxu0 0
        %946 = vmatpush2.bf16.msra.mxu0 %v762
        %947 = vmatprep.subr.bf16.mxu0 0
        %948 = vmatpush2.bf16.msra.mxu0 %v761
        %949 = vmatprep.subr.bf16.mxu0 0
        %950 = vmatpush2.bf16.msra.mxu0 %v760
        %951 = vmatprep.subr.bf16.mxu0 0
        %952 = vmatpush2.bf16.msra.mxu0 %v759
        %953 = vmatprep.subr.bf16.mxu0 0
        %954 = vmatpush2.bf16.msra.mxu0 %v758
        %955 = vmatprep.subr.bf16.mxu0 0
        %956 = vmatpush2.bf16.msra.mxu0 %v757
        %957 = vmatprep.mubr.bf16.mxu0 %v448
        %958 = vmatmul.mubr.bf16.gmra.mxu0 %v434
        %v959 = vpop.f32.mrf.mxu0
        %v960 = vadd.f32 %v920, %v959
        %v961 = vpop.f32.mrf.mxu0
        %v962 = vpop.f32.mrf.mxu0
        %v963 = vpop.f32.mrf.mxu0
        %964 = vdwg.mxu0
        %965 = vmatprep.subr.bf16.mxu0 0
        %966 = vmatpush1.bf16.msra.mxu0 %v772
        %967 = vmatprep.subr.bf16.mxu0 0
        %968 = vmatpush1.bf16.msra.mxu0 %v771
        %969 = vmatprep.subr.bf16.mxu0 0
        %970 = vmatpush1.bf16.msra.mxu0 %v770
        %971 = vmatprep.subr.bf16.mxu0 0
        %972 = vmatpush1.bf16.msra.mxu0 %v769
        %973 = vmatprep.subr.bf16.mxu0 0
        %974 = vmatpush1.bf16.msra.mxu0 %v768
        %975 = vmatprep.subr.bf16.mxu0 0
        %976 = vmatpush1.bf16.msra.mxu0 %v767
        %977 = vmatprep.subr.bf16.mxu0 0
        %978 = vmatpush1.bf16.msra.mxu0 %v766
        %979 = vmatprep.subr.bf16.mxu0 0
        %980 = vmatpush1.bf16.msra.mxu0 %v765
        %981 = vmatprep.subr.bf16.mxu0 0
        %982 = vmatpush2.bf16.msra.mxu0 %v780
        %983 = vmatprep.subr.bf16.mxu0 0
        %984 = vmatpush2.bf16.msra.mxu0 %v779
        %985 = vmatprep.subr.bf16.mxu0 0
        %986 = vmatpush2.bf16.msra.mxu0 %v778
        %987 = vmatprep.subr.bf16.mxu0 0
        %988 = vmatpush2.bf16.msra.mxu0 %v777
        %989 = vmatprep.subr.bf16.mxu0 0
        %990 = vmatpush2.bf16.msra.mxu0 %v776
        %991 = vmatprep.subr.bf16.mxu0 0
        %992 = vmatpush2.bf16.msra.mxu0 %v775
        %993 = vmatprep.subr.bf16.mxu0 0
        %994 = vmatpush2.bf16.msra.mxu0 %v774
        %995 = vmatprep.subr.bf16.mxu0 0
        %996 = vmatpush2.bf16.msra.mxu0 %v773
        %997 = vmatprep.mubr.bf16.mxu0 %v452
        %998 = vmatmul.mubr.bf16.gmra.mxu0 %v450
        %v999 = vpop.f32.mrf.mxu0
        %v1000 = vadd.f32 %v960, %v999
        %v1001 = vpop.f32.mrf.mxu0
        %v1002 = vpop.f32.mrf.mxu0
        %v1003 = vpop.f32.mrf.mxu0
        %1004 = vdwg.mxu0
        %v1005 = vadd.f32 %v273, %v1000
        %1006 = vst [vmem:[#allocation2] sm:$0x3] %v1005
        // Predicated region
        $region45: #{maple_iqa_forward.2} parent=35 // pred_check
          %p1007 = pneg %p268
        $region46: #{maple_iqa_forward.2} parent=35 // pred_check_branch
          %1009 = sbr.rel (%p1007) target = $region48
        $region47: #{maple_iqa_forward.2} parent=35 // pred_region
          %v1010 = vld [vmem:[#allocation2] sm:$0x3]
          %s1011 = sld [smem:[#allocation3]]
          %v1012 = vld [vmem:[%s262] sm:$0x1]
          %v1013 = vmul.f32 %v1010, %v1010
          %vm1014 = vcmask 1041408
          %v1015 = vsel %vm1014, %v1013, 0.0
          %1016 = vadd.xlane.f32.xlu0 %v1015
          %v1017 = vpop.xlane.xlu0 %1016
          %v1018 = vadd.f32 %v1017, 1e-24
          %v1019 = vrsqrt.pop %v1018
          %v1020 = vstv %s1011
          %v1021 = vmul.f32 %v1020, %v1019
          %v1023 = vlaneseq
          %v1024 = vshrl.u32 %v1023, 7
          %v1025 = vsub.s32 0, %v1024
          %v1026 = vrot.slane %v1012, %v1025
          %v1028 = vmul.f32 %v1010, %v1026
          %v1029 = vsel %vm1014, %v1028, 0.0
          %1030 = vadd.xlane.f32.xlu0 %v1029
          %v1031 = vpop.xlane.xlu0 %1030
          %v1032 = vmul.f32 %v1021, %v1031
          %1033 = vst [vmem:[%s266] sm:$0x3] %v1032
        $region48: #{maple_iqa_forward.2} parent=35 // pred_fallthru
          _
        %p1034 = scmp.lt.s32.totalorder %s23, 1
        %s1035 = scalar_select %p1034, %s23, 1
        %s1036 = smul.addr %s1035, 2
        %s1037 = scalar_lea.vmem %s4, %s1036
        // Predicated region
        $region49: #{maple_iqa_forward.2} parent=35 // pred_check
          %p1038 = pneg %p150
        $region50: #{maple_iqa_forward.2} parent=35 // pred_check_branch
          %1040 = sbr.rel (%p1038) target = $region52
        $region51: #{maple_iqa_forward.2} parent=35 // pred_region
          _
        $region52: #{maple_iqa_forward.2} parent=35 // pred_fallthru
          _
      $region36: #{maple_iqa_forward.2} parent=5 // pred_fallthru
        _
      %p1041 = scmp.le.s32.totalorder 2, %s14
      // Predicated region
      $region53: #{maple_iqa_forward.2} parent=5 // pred_check
        %p1042 = pneg %p1041
      $region54: #{maple_iqa_forward.2} parent=5 // pred_check_branch
        %1044 = sbr.rel (%p1042) target = $region56
      $region55: #{maple_iqa_forward.2} parent=5 // pred_region
        %s1045 = ssub.s32 %s14, 2
        // Predicated region
        $region57: #{maple_iqa_forward.2} parent=55 // pred_check
          %p1046 = pneg %p156
        $region58: #{maple_iqa_forward.2} parent=55 // pred_check_branch
          %1048 = sbr.rel (%p1046) target = $region60
        $region59: #{maple_iqa_forward.2} parent=55 // pred_region
          %p1049 = scmp.lt.s32.totalorder %s25, 1
          %s1050 = scalar_select %p1049, %s25, 1
          %s1051 = smul.addr %s1050, 2
          %s1052 = scalar_lea.vmem %s4, %s1051
        $region60: #{maple_iqa_forward.2} parent=55 // pred_fallthru
          _
      $region56: #{maple_iqa_forward.2} parent=5 // pred_fallthru
        _
    $region6: #{maple_iqa_forward.2} parent=1 // loop_footer
      %s18 = sadd.s32 1, %s14
    $region7: #{maple_iqa_forward.2} parent=1 // loop_footer_branch
      %13 = sbr.rel target = $region3
    $region8: #{maple_iqa_forward.2} parent=1 // loop_exit
      _
    %1053 = vsyncpa [#allocation5], 1
    %s1054 = scalar_lea.sflag [#allocation5], 1
    %1055 = vsyncpa %s1054, 1

</llo_original>
